<compile_context>
chip_gen: v5e
topology: v5e:2x2
jax: 0.10.0
libtpu: 0.0.40
codegen_flags: <defaults>
</compile_context>

<pallas_src>
import jax
import jax.numpy as jnp
from jax.experimental import pallas as pl
from jax.experimental.pallas import tpu as pltpu


# ----------------------------------------------------------------------------
# Kernel factory: one grid step = one batch block, all heads fused in-kernel.
# ----------------------------------------------------------------------------
def _make_mha_kernel(n_heads, share_qkv, compute_dtype):
    def kernel(pi_ref, scale_ref, *refs):
        if share_qkv:
            (x_ref, pe_ref, wq_ref, bq_ref, wk_ref, bk_ref,
             wv_ref, bv_ref, wo_ref, bo_ref, out_ref, attn_ref) = refs
            q_ref = k_ref = v_ref = x_ref
        else:
            (q_ref, k_ref, v_ref, pe_ref, wq_ref, bq_ref, wk_ref, bk_ref,
             wv_ref, bv_ref, wo_ref, bo_ref, out_ref, attn_ref) = refs

        f32 = jnp.float32
        cdt = compute_dtype
        H = n_heads
        B, L, Dm = q_ref.shape
        dk = wq_ref.shape[1] // H
        dv = wv_ref.shape[1] // H

        pe = pe_ref[...].astype(f32)                         # [L, Dm]
        scale = scale_ref[0]

        # --- positional-encoding mix (f32), then demote to MXU dtype ---------
        if share_qkv:
            x = q_ref[...].astype(f32)                       # single DMA'd block
            xq = (x + pi_ref[0] * pe).reshape(B * L, Dm).astype(cdt)
            xk = (x + pi_ref[1] * pe).reshape(B * L, Dm).astype(cdt)
            xv = (x + pi_ref[2] * pe).reshape(B * L, Dm).astype(cdt)
        else:
            xq = (q_ref[...].astype(f32) + pi_ref[0] * pe).reshape(B * L, Dm).astype(cdt)
            xk = (k_ref[...].astype(f32) + pi_ref[1] * pe).reshape(B * L, Dm).astype(cdt)
            xv = (v_ref[...].astype(f32) + pi_ref[2] * pe).reshape(B * L, Dm).astype(cdt)

        # --- fused all-heads projections: one wide matmul each (N = H*dk/H*dv)
        # scale is folded into q here (whole q_s * scale, incl. bias, as in ref).
        q2 = (jnp.dot(xq, wq_ref[...], preferred_element_type=f32) + bq_ref[...]) * scale
        k2 = jnp.dot(xk, wk_ref[...], preferred_element_type=f32) + bk_ref[...]
        v2 = jnp.dot(xv, wv_ref[...], preferred_element_type=f32) + bv_ref[...]

        q3 = q2.astype(cdt).reshape(B, L, H * dk)
        k3 = k2.astype(cdt).reshape(B, L, H * dk)
        v3 = v2.astype(cdt).reshape(B, L, H * dv)

        # --- per-head scaled dot-product attention (static small head loop) --
        # TODO(synk): optional `prev`, `attn_mask`, `key_padding_mask`,
        # `init_sim_m`/`pis` terms are not implemented (default None path only).
        attn_parts = []
        head_parts = []
        for h in range(H):
            qh = q3[:, :, h * dk:(h + 1) * dk]               # [B, L, dk] (bf16)
            kh = k3[:, :, h * dk:(h + 1) * dk]
            vh = v3[:, :, h * dv:(h + 1) * dv]
            scores = jnp.einsum("bqd,bkd->bqk", qh, kh,
                                preferred_element_type=f32)  # [B, L, L] f32
            m = jnp.max(scores, axis=-1, keepdims=True)
            e = jnp.exp(scores - m)                          # softmax math in f32
            denom = jnp.sum(e, axis=-1, keepdims=True)
            attn_h = e * pl.reciprocal(denom, approx=True)   # EUP divide
            attn_parts.append(attn_h.reshape(B, 1, L * L))
            head_parts.append(
                jnp.einsum("bqk,bkd->bqd", attn_h.astype(cdt), vh,
                           preferred_element_type=f32))      # [B, L, dv] f32

        # --- lane-dense attention-weight store: (B, H, L*L) ------------------
        attn_ref[...] = jnp.concatenate(attn_parts, axis=1).astype(attn_ref.dtype)

        # --- output projection: one wide matmul over concatenated heads ------
        concat = jnp.concatenate(head_parts, axis=-1).reshape(B * L, H * dv).astype(cdt)
        out = jnp.dot(concat, wo_ref[...], preferred_element_type=f32) + bo_ref[...]
        out_ref[...] = out.reshape(B, L, Dm).astype(out_ref.dtype)

    return kernel


# ----------------------------------------------------------------------------
# Batch-block selection from a VMEM byte budget (keeps >=2 grid steps for v7x).
# ----------------------------------------------------------------------------
def _pick_batch_block(bs, L, d_model, n_heads, dk, dv, in_bytes, out_bytes,
                      n_act_inputs, budget_bytes):
    cap = max(1, bs // 2) if bs >= 2 else 1      # >=2 "parallel" steps: both v7x TCs
    best = 1
    weights_bytes = (4 * L * d_model                               # PE (f32)
                     + 2 * (d_model * n_heads * (2 * dk + dv)      # Wq/Wk/Wv (bf16)
                            + n_heads * dv * d_model)              # Wo (bf16)
                     + 4 * (n_heads * (2 * dk + dv) + d_model))    # biases (f32)
    for cand in range(1, cap + 1):
        if bs % cand:
            continue
        blk = cand * L * (n_act_inputs * d_model * in_bytes        # activation blocks
                          + d_model * out_bytes)                   # out block
        blk += cand * n_heads * L * L * 4                          # attn block (f32)
        resident = 2 * blk + weights_bytes                         # double-buffered
        # rough compute temporaries: q/k/v projections, concat, per-head scores
        resident += cand * L * 4 * (3 * n_heads * dk + 2 * n_heads * dv + d_model)
        resident += cand * L * L * 4 * 3
        if resident <= budget_bytes:
            best = cand
    return best


# ----------------------------------------------------------------------------
# Wrapper
# ----------------------------------------------------------------------------
def multihead_attention(Q, K, V, PE, pi, w_q, b_q, w_k, b_k, w_v, b_v,
                        w_o, b_o, scale, *, n_heads, batch_block=None,
                        compute_dtype=jnp.bfloat16,
                        vmem_limit_bytes=48 * 1024 * 1024):
    """Fused forward of PatchTST `_MultiheadAttention` (eval mode, no masks).

    Q, K, V : [bs, L, d_model]  (K/V default to Q, as in the module)
    PE      : [L, d_model]      pi: 3 scalars     scale: scalar
    w_q/w_k : [d_model, n_heads*d_k]   w_v: [d_model, n_heads*d_v]
    w_o     : [n_heads*d_v, d_model]   (nn.Linear weights stored transposed)
    Returns (output [bs, L, d_model], attn_weights [bs, n_heads, L, L]).
    """
    share = (K is None or K is Q) and (V is None or V is Q)
    if K is None:
        K = Q
    if V is None:
        V = Q
    assert Q.shape == K.shape == V.shape, "self-attention shapes expected"
    bs, L, d_model = Q.shape
    dk = w_q.shape[1] // n_heads
    dv = w_v.shape[1] // n_heads
    cdt = jnp.dtype(compute_dtype)

    # Weights demoted to the MXU dtype once in the wrapper (halves their DMA);
    # biases stay f32 (added after f32 accumulation).
    wq = w_q.astype(cdt)
    wk = w_k.astype(cdt)
    wv = w_v.astype(cdt)
    wo = w_o.astype(cdt)
    bq2 = b_q.reshape(1, n_heads * dk).astype(jnp.float32)
    bk2 = b_k.reshape(1, n_heads * dk).astype(jnp.float32)
    bv2 = b_v.reshape(1, n_heads * dv).astype(jnp.float32)
    bo2 = b_o.reshape(1, d_model).astype(jnp.float32)
    pi_s = jnp.asarray(pi, jnp.float32).reshape(3)
    scale_s = jnp.asarray(scale, jnp.float32).reshape(1)

    in_bytes = jnp.dtype(Q.dtype).itemsize
    out_bytes = in_bytes
    n_act = 1 if share else 3
    b_blk = batch_block if batch_block is not None else _pick_batch_block(
        bs, L, d_model, n_heads, dk, dv, in_bytes, out_bytes, n_act,
        budget_bytes=vmem_limit_bytes // 2)
    assert bs % b_blk == 0
    nb = bs // b_blk

    acts = (Q,) if share else (Q, K, V)
    smem = pl.BlockSpec(memory_space=pltpu.MemorySpace.SMEM)
    act_spec = pl.BlockSpec((b_blk, L, d_model), lambda bb: (bb, 0, 0))
    # Weights/biases: full-extent blocks with constant index_map -> fetched once,
    # stay resident in VMEM across the whole grid.
    in_specs = (
        [smem, smem]
        + [act_spec] * n_act
        + [pl.BlockSpec((L, d_model), lambda bb: (0, 0)),              # PE
           pl.BlockSpec((d_model, n_heads * dk), lambda bb: (0, 0)),   # Wq (fused)
           pl.BlockSpec((1, n_heads * dk), lambda bb: (0, 0)),         # bq
           pl.BlockSpec((d_model, n_heads * dk), lambda bb: (0, 0)),   # Wk
           pl.BlockSpec((1, n_heads * dk), lambda bb: (0, 0)),         # bk
           pl.BlockSpec((d_model, n_heads * dv), lambda bb: (0, 0)),   # Wv
           pl.BlockSpec((1, n_heads * dv), lambda bb: (0, 0)),         # bv
           pl.BlockSpec((n_heads * dv, d_model), lambda bb: (0, 0)),   # Wo
           pl.BlockSpec((1, d_model), lambda bb: (0, 0))])             # b_o

    # Advisory cost estimate (helps XLA schedule around this mem-bound call).
    flops = (2 * bs * L * d_model * n_heads * (2 * dk + dv)
             + 2 * bs * n_heads * L * L * (dk + dv)
             + 2 * bs * L * n_heads * dv * d_model)
    transcendentals = bs * n_heads * L * (L + 1)
    bytes_accessed = (in_bytes * n_act * bs * L * d_model
                      + 4 * L * d_model
                      + cdt.itemsize * (d_model * n_heads * (2 * dk + dv)
                                        + n_heads * dv * d_model)
                      + 4 * (n_heads * (2 * dk + dv) + d_model)
                      + out_bytes * bs * L * d_model
                      + 4 * bs * n_heads * L * L)

    kernel = _make_mha_kernel(n_heads, share, cdt)
    out, attn_flat = pl.pallas_call(
        kernel,
        out_shape=(
            jax.ShapeDtypeStruct((bs, L, d_model), Q.dtype),
            jax.ShapeDtypeStruct((bs, n_heads, L * L), jnp.float32),  # lane-dense
        ),
        grid_spec=pltpu.PrefetchScalarGridSpec(
            num_scalar_prefetch=0,
            grid=(nb,),
            in_specs=in_specs,
            out_specs=(
                pl.BlockSpec((b_blk, L, d_model), lambda bb: (bb, 0, 0)),
                pl.BlockSpec((b_blk, n_heads, L * L), lambda bb: (bb, 0, 0)),
            )),
        compiler_params=pltpu.CompilerParams(
            dimension_semantics=("parallel",),
            vmem_limit_bytes=vmem_limit_bytes),
        cost_estimate=pl.CostEstimate(flops=flops,
                                      transcendentals=transcendentals,
                                      bytes_accessed=bytes_accessed),
    )(pi_s, scale_s, *acts, PE, wq, bq2, wk, bk2, wv, bv2, wo, bo2)

    return out, attn_flat.reshape(bs, n_heads, L, L)


# ----------------------------------------------------------------------------
# Pure-JAX reference (mirrors the PyTorch module, eval mode, None masks)
# ----------------------------------------------------------------------------
def _ref_mha(Q, K, V, PE, pi, w_q, b_q, w_k, b_k, w_v, b_v, w_o, b_o, scale, *, n_heads):
    if K is None:
        K = Q
    if V is None:
        V = Q
    bs, L, d_model = Q.shape
    dk = w_q.shape[1] // n_heads
    dv = w_v.shape[1] // n_heads
    hp = jax.lax.Precision.HIGHEST
    pi = jnp.asarray(pi, jnp.float32)
    Qp, Kp, Vp = Q + pi[0] * PE, K + pi[1] * PE, V + pi[2] * PE
    q_s = (jnp.dot(Qp, w_q, precision=hp) + b_q).reshape(bs, L, n_heads, dk).transpose(0, 2, 1, 3)
    k_s = (jnp.dot(Kp, w_k, precision=hp) + b_k).reshape(bs, L, n_heads, dk).transpose(0, 2, 1, 3)
    v_s = (jnp.dot(Vp, w_v, precision=hp) + b_v).reshape(bs, L, n_heads, dv).transpose(0, 2, 1, 3)
    scores = jnp.einsum("bhqe,bhke->bhqk", q_s, k_s, precision=hp) * scale
    attn = jax.nn.softmax(scores, axis=-1)
    head_out = jnp.einsum("bhqk,bhke->bhqe", attn, v_s, precision=hp)
    concat = head_out.transpose(0, 2, 1, 3).reshape(bs, L, n_heads * dv)
    out = jnp.dot(concat, w_o, precision=hp) + b_o
    return out.astype(Q.dtype), attn


if __name__ == "__main__":
    # Small shapes consistent with the module: bs=2, q_len=8, d_model=32, heads=4.
    bs, L, d_model, n_heads = 2, 8, 32, 4
    dk = dv = d_model // n_heads                     # 8

    key = jax.random.PRNGKey(0)
    keys = jax.random.split(key, 12)

    Q = jax.random.normal(keys[0], (bs, L, d_model), jnp.float32)
    PE = 0.1 * jax.random.normal(keys[1], (L, d_model), jnp.float32)
    pi = jnp.array([0.7, 0.5, 0.3], jnp.float32)

    bqkv = 1.0 / (d_model ** 0.5)
    bo_b = 1.0 / ((n_heads * dv) ** 0.5)
    w_q = jax.random.uniform(keys[2], (d_model, n_heads * dk), jnp.float32, -bqkv, bqkv)
    b_q = jax.random.uniform(keys[3], (n_heads * dk,), jnp.float32, -bqkv, bqkv)
    w_k = jax.random.uniform(keys[4], (d_model, n_heads * dk), jnp.float32, -bqkv, bqkv)
    b_k = jax.random.uniform(keys[5], (n_heads * dk,), jnp.float32, -bqkv, bqkv)
    w_v = jax.random.uniform(keys[6], (d_model, n_heads * dv), jnp.float32, -bqkv, bqkv)
    b_v = jax.random.uniform(keys[7], (n_heads * dv,), jnp.float32, -bqkv, bqkv)
    w_o = jax.random.uniform(keys[8], (n_heads * dv, d_model), jnp.float32, -bo_b, bo_b)
    b_o = jax.random.uniform(keys[9], (d_model,), jnp.float32, -bo_b, bo_b)
    scale = (d_model // n_heads) ** -0.5             # _ScaledDotProductAttention (lsa=False)

    tol = dict(atol=2e-2, rtol=2e-2)                 # bf16 MXU operands, f32 accumulation

    # --- default self-attention path (K = V = None -> deduped activation DMA) --
    out, attn = multihead_attention(
        Q, None, None, PE, pi, w_q, b_q, w_k, b_k, w_v, b_v, w_o, b_o, scale,
        n_heads=n_heads)
    out = jax.block_until_ready(out)
    attn = jax.block_until_ready(attn)
    out_exp, attn_exp = _ref_mha(
        Q, None, None, PE, pi, w_q, b_q, w_k, b_k, w_v, b_v, w_o, b_o, scale,
        n_heads=n_heads)
    assert out.shape == (bs, L, d_model)
    assert attn.shape == (bs, n_heads, L, L)
    assert jnp.allclose(out, out_exp, **tol), float(jnp.max(jnp.abs(out - out_exp)))
    assert jnp.allclose(attn, attn_exp, **tol), float(jnp.max(jnp.abs(attn - attn_exp)))

    # --- distinct K / V path (separate activation inputs) -----------------------
    K_in = jax.random.normal(keys[10], (bs, L, d_model), jnp.float32)
    V_in = jax.random.normal(keys[11], (bs, L, d_model), jnp.float32)
    out2, attn2 = multihead_attention(
        Q, K_in, V_in, PE, pi, w_q, b_q, w_k, b_k, w_v, b_v, w_o, b_o, scale,
        n_heads=n_heads)
    out2 = jax.block_until_ready(out2)
    attn2 = jax.block_until_ready(attn2)
    out2_exp, attn2_exp = _ref_mha(
        Q, K_in, V_in, PE, pi, w_q, b_q, w_k, b_k, w_v, b_v, w_o, b_o, scale,
        n_heads=n_heads)
    assert jnp.allclose(out2, out2_exp, **tol), float(jnp.max(jnp.abs(out2 - out2_exp)))
    assert jnp.allclose(attn2, attn2_exp, **tol), float(jnp.max(jnp.abs(attn2 - attn2_exp)))

    print("KERNEL_OK")
</pallas_src>

<mosaic_0001>
module attributes {stable_mosaic.version = 11 : i64} {
  func.func @kernel(%arg0: i32, %arg1: memref<3xf32, #tpu.memory_space<smem>>, %arg2: memref<1xf32, #tpu.memory_space<smem>>, %arg3: memref<1x8x32xf32, #tpu.memory_space<vmem>>, %arg4: memref<8x32xf32, #tpu.memory_space<vmem>>, %arg5: memref<32x32xbf16, #tpu.memory_space<vmem>>, %arg6: memref<1x32xf32, #tpu.memory_space<vmem>>, %arg7: memref<32x32xbf16, #tpu.memory_space<vmem>>, %arg8: memref<1x32xf32, #tpu.memory_space<vmem>>, %arg9: memref<32x32xbf16, #tpu.memory_space<vmem>>, %arg10: memref<1x32xf32, #tpu.memory_space<vmem>>, %arg11: memref<32x32xbf16, #tpu.memory_space<vmem>>, %arg12: memref<1x32xf32, #tpu.memory_space<vmem>>, %arg13: memref<1x8x32xf32, #tpu.memory_space<vmem>>, %arg14: memref<1x4x64xf32, #tpu.memory_space<vmem>>) attributes {dimension_semantics = [#tpu.dimension_semantics<parallel>], iteration_bounds = array<i64: 2>, scalar_prefetch = 0 : i64, scratch_operands = 0 : i64, tpu.core_type = #tpu.core_type<tc>, window_params = [{transform_indices = @transform_0, window_bounds = array<i64: 3>}, {transform_indices = @transform_1, window_bounds = array<i64: 1>}, {transform_indices = @transform_2, window_bounds = array<i64: 1, 8, 32>}, {pipeline_mode = #tpu.pipeline_mode<synchronous>, transform_indices = @transform_3, window_bounds = array<i64: 8, 32>}, {pipeline_mode = #tpu.pipeline_mode<synchronous>, transform_indices = @transform_4, window_bounds = array<i64: 32, 32>}, {pipeline_mode = #tpu.pipeline_mode<synchronous>, transform_indices = @transform_5, window_bounds = array<i64: 1, 32>}, {pipeline_mode = #tpu.pipeline_mode<synchronous>, transform_indices = @transform_6, window_bounds = array<i64: 32, 32>}, {pipeline_mode = #tpu.pipeline_mode<synchronous>, transform_indices = @transform_7, window_bounds = array<i64: 1, 32>}, {pipeline_mode = #tpu.pipeline_mode<synchronous>, transform_indices = @transform_8, window_bounds = array<i64: 32, 32>}, {pipeline_mode = #tpu.pipeline_mode<synchronous>, transform_indices = @transform_9, window_bounds = array<i64: 1, 32>}, {pipeline_mode = #tpu.pipeline_mode<synchronous>, transform_indices = @transform_10, window_bounds = array<i64: 32, 32>}, {pipeline_mode = #tpu.pipeline_mode<synchronous>, transform_indices = @transform_11, window_bounds = array<i64: 1, 32>}, {transform_indices = @transform_12, window_bounds = array<i64: 1, 8, 32>}, {transform_indices = @transform_13, window_bounds = array<i64: 1, 4, 64>}]} {
    %c0 = arith.constant 0 : index
    %c0_0 = arith.constant 0 : index
    %0 = vector.load %arg4[%c0, %c0_0] : memref<8x32xf32, #tpu.memory_space<vmem>>, vector<8x32xf32>
    %c0_1 = arith.constant 0 : index
    %1 = memref.load %arg2[%c0_1] : memref<1xf32, #tpu.memory_space<smem>>
    %c0_2 = arith.constant 0 : index
    %c0_3 = arith.constant 0 : index
    %c0_4 = arith.constant 0 : index
    %2 = vector.load %arg3[%c0_2, %c0_3, %c0_4] : memref<1x8x32xf32, #tpu.memory_space<vmem>>, vector<1x8x32xf32>
    %c0_5 = arith.constant 0 : index
    %3 = memref.load %arg1[%c0_5] : memref<3xf32, #tpu.memory_space<smem>>
    %4 = vector.broadcast %3 : f32 to vector<8x32xf32>
    %5 = arith.mulf %4, %0 : vector<8x32xf32>
    %6 = vector.shape_cast %5 : vector<8x32xf32> to vector<1x8x32xf32>
    %7 = arith.addf %2, %6 : vector<1x8x32xf32>
    %8 = vector.shape_cast %7 : vector<1x8x32xf32> to vector<8x32xf32>
    %9 = arith.truncf %8 : vector<8x32xf32> to vector<8x32xbf16>
    %c1 = arith.constant 1 : index
    %10 = memref.load %arg1[%c1] : memref<3xf32, #tpu.memory_space<smem>>
    %11 = vector.broadcast %10 : f32 to vector<8x32xf32>
    %12 = arith.mulf %11, %0 : vector<8x32xf32>
    %13 = vector.shape_cast %12 : vector<8x32xf32> to vector<1x8x32xf32>
    %14 = arith.addf %2, %13 : vector<1x8x32xf32>
    %15 = vector.shape_cast %14 : vector<1x8x32xf32> to vector<8x32xf32>
    %16 = arith.truncf %15 : vector<8x32xf32> to vector<8x32xbf16>
    %c2 = arith.constant 2 : index
    %17 = memref.load %arg1[%c2] : memref<3xf32, #tpu.memory_space<smem>>
    %18 = vector.broadcast %17 : f32 to vector<8x32xf32>
    %19 = arith.mulf %18, %0 : vector<8x32xf32>
    %20 = vector.shape_cast %19 : vector<8x32xf32> to vector<1x8x32xf32>
    %21 = arith.addf %2, %20 : vector<1x8x32xf32>
    %22 = vector.shape_cast %21 : vector<1x8x32xf32> to vector<8x32xf32>
    %23 = arith.truncf %22 : vector<8x32xf32> to vector<8x32xbf16>
    %c0_6 = arith.constant 0 : index
    %c0_7 = arith.constant 0 : index
    %24 = vector.load %arg5[%c0_6, %c0_7] : memref<32x32xbf16, #tpu.memory_space<vmem>>, vector<32x32xbf16>
    %cst = arith.constant dense<0.000000e+00> : vector<8x32xf32>
    %25 = tpu.matmul %9, %24, %cst {dimension_numbers = #tpu.dot_dimension_numbers<[1], [0], [0], [1], [0, 0, 1, 1], [], []>} : vector<8x32xbf16>, vector<32x32xbf16>, vector<8x32xf32> -> vector<8x32xf32>
    %c0_8 = arith.constant 0 : index
    %c0_9 = arith.constant 0 : index
    %26 = vector.load %arg6[%c0_8, %c0_9] : memref<1x32xf32, #tpu.memory_space<vmem>>, vector<1x32xf32>
    %27 = vector.broadcast %26 : vector<1x32xf32> to vector<8x32xf32>
    %28 = arith.addf %25, %27 : vector<8x32xf32>
    %29 = vector.broadcast %1 : f32 to vector<8x32xf32>
    %30 = arith.mulf %28, %29 : vector<8x32xf32>
    %c0_10 = arith.constant 0 : index
    %c0_11 = arith.constant 0 : index
    %31 = vector.load %arg7[%c0_10, %c0_11] : memref<32x32xbf16, #tpu.memory_space<vmem>>, vector<32x32xbf16>
    %cst_12 = arith.constant dense<0.000000e+00> : vector<8x32xf32>
    %32 = tpu.matmul %16, %31, %cst_12 {dimension_numbers = #tpu.dot_dimension_numbers<[1], [0], [0], [1], [0, 0, 1, 1], [], []>} : vector<8x32xbf16>, vector<32x32xbf16>, vector<8x32xf32> -> vector<8x32xf32>
    %c0_13 = arith.constant 0 : index
    %c0_14 = arith.constant 0 : index
    %33 = vector.load %arg8[%c0_13, %c0_14] : memref<1x32xf32, #tpu.memory_space<vmem>>, vector<1x32xf32>
    %34 = vector.broadcast %33 : vector<1x32xf32> to vector<8x32xf32>
    %35 = arith.addf %32, %34 : vector<8x32xf32>
    %c0_15 = arith.constant 0 : index
    %c0_16 = arith.constant 0 : index
    %36 = vector.load %arg9[%c0_15, %c0_16] : memref<32x32xbf16, #tpu.memory_space<vmem>>, vector<32x32xbf16>
    %cst_17 = arith.constant dense<0.000000e+00> : vector<8x32xf32>
    %37 = tpu.matmul %23, %36, %cst_17 {dimension_numbers = #tpu.dot_dimension_numbers<[1], [0], [0], [1], [0, 0, 1, 1], [], []>} : vector<8x32xbf16>, vector<32x32xbf16>, vector<8x32xf32> -> vector<8x32xf32>
    %c0_18 = arith.constant 0 : index
    %c0_19 = arith.constant 0 : index
    %38 = vector.load %arg10[%c0_18, %c0_19] : memref<1x32xf32, #tpu.memory_space<vmem>>, vector<1x32xf32>
    %39 = vector.broadcast %38 : vector<1x32xf32> to vector<8x32xf32>
    %40 = arith.addf %37, %39 : vector<8x32xf32>
    %41 = arith.truncf %30 : vector<8x32xf32> to vector<8x32xbf16>
    %42 = vector.shape_cast %41 : vector<8x32xbf16> to vector<1x8x32xbf16>
    %43 = arith.truncf %35 : vector<8x32xf32> to vector<8x32xbf16>
    %44 = vector.shape_cast %43 : vector<8x32xbf16> to vector<1x8x32xbf16>
    %45 = arith.truncf %40 : vector<8x32xf32> to vector<8x32xbf16>
    %46 = vector.shape_cast %45 : vector<8x32xbf16> to vector<1x8x32xbf16>
    %47 = vector.extract_strided_slice %42 {offsets = [0, 0, 0], sizes = [1, 8, 8], strides = [1, 1, 1]} : vector<1x8x32xbf16> to vector<1x8x8xbf16>
    %48 = vector.extract_strided_slice %44 {offsets = [0, 0, 0], sizes = [1, 8, 8], strides = [1, 1, 1]} : vector<1x8x32xbf16> to vector<1x8x8xbf16>
    %49 = vector.extract_strided_slice %46 {offsets = [0, 0, 0], sizes = [1, 8, 8], strides = [1, 1, 1]} : vector<1x8x32xbf16> to vector<1x8x8xbf16>
    "tpu.trace_start"() <{level = 10 : i32, message = "bqd,bkd->bqk"}> : () -> ()
    %cst_20 = arith.constant dense<0.000000e+00> : vector<1x8x8xf32>
    %50 = tpu.matmul %47, %48, %cst_20 {dimension_numbers = #tpu.dot_dimension_numbers<[2], [2], [1], [1], [0, 0, 0, 1, 1, 1], [0], [0]>} : vector<1x8x8xbf16>, vector<1x8x8xbf16>, vector<1x8x8xf32> -> vector<1x8x8xf32>
    "tpu.trace_stop"() : () -> ()
    %cst_21 = arith.constant dense<0xFF800000> : vector<1x8xf32>
    %51 = vector.multi_reduction <maximumf>, %50, %cst_21 [2] : vector<1x8x8xf32> to vector<1x8xf32>
    %52 = vector.shape_cast %51 : vector<1x8xf32> to vector<1x8x1xf32>
    %53 = vector.broadcast %52 : vector<1x8x1xf32> to vector<1x8x8xf32>
    %54 = arith.subf %50, %53 : vector<1x8x8xf32>
    %55 = math.exp %54 : vector<1x8x8xf32>
    %cst_22 = arith.constant dense<0.000000e+00> : vector<1x8xf32>
    %56 = vector.multi_reduction <add>, %55, %cst_22 [2] : vector<1x8x8xf32> to vector<1x8xf32>
    %57 = vector.shape_cast %56 : vector<1x8xf32> to vector<1x8x1xf32>
    %58 = tpu.reciprocal %57 {approx = true} : vector<1x8x1xf32> -> vector<1x8x1xf32>
    %59 = vector.broadcast %58 : vector<1x8x1xf32> to vector<1x8x8xf32>
    %60 = arith.mulf %55, %59 : vector<1x8x8xf32>
    %61 = vector.shape_cast %60 : vector<1x8x8xf32> to vector<1x1x64xf32>
    %62 = arith.truncf %60 : vector<1x8x8xf32> to vector<1x8x8xbf16>
    "tpu.trace_start"() <{level = 10 : i32, message = "bqk,bkd->bqd"}> : () -> ()
    %cst_23 = arith.constant dense<0.000000e+00> : vector<1x8x8xf32>
    %63 = tpu.matmul %62, %49, %cst_23 {dimension_numbers = #tpu.dot_dimension_numbers<[2], [1], [1], [2], [0, 0, 0, 1, 1, 2], [0], [0]>} : vector<1x8x8xbf16>, vector<1x8x8xbf16>, vector<1x8x8xf32> -> vector<1x8x8xf32>
    "tpu.trace_stop"() : () -> ()
    %64 = vector.extract_strided_slice %42 {offsets = [0, 0, 8], sizes = [1, 8, 8], strides = [1, 1, 1]} : vector<1x8x32xbf16> to vector<1x8x8xbf16>
    %65 = vector.extract_strided_slice %44 {offsets = [0, 0, 8], sizes = [1, 8, 8], strides = [1, 1, 1]} : vector<1x8x32xbf16> to vector<1x8x8xbf16>
    %66 = vector.extract_strided_slice %46 {offsets = [0, 0, 8], sizes = [1, 8, 8], strides = [1, 1, 1]} : vector<1x8x32xbf16> to vector<1x8x8xbf16>
    "tpu.trace_start"() <{level = 10 : i32, message = "bqd,bkd->bqk"}> : () -> ()
    %cst_24 = arith.constant dense<0.000000e+00> : vector<1x8x8xf32>
    %67 = tpu.matmul %64, %65, %cst_24 {dimension_numbers = #tpu.dot_dimension_numbers<[2], [2], [1], [1], [0, 0, 0, 1, 1, 1], [0], [0]>} : vector<1x8x8xbf16>, vector<1x8x8xbf16>, vector<1x8x8xf32> -> vector<1x8x8xf32>
    "tpu.trace_stop"() : () -> ()
    %cst_25 = arith.constant dense<0xFF800000> : vector<1x8xf32>
    %68 = vector.multi_reduction <maximumf>, %67, %cst_25 [2] : vector<1x8x8xf32> to vector<1x8xf32>
    %69 = vector.shape_cast %68 : vector<1x8xf32> to vector<1x8x1xf32>
    %70 = vector.broadcast %69 : vector<1x8x1xf32> to vector<1x8x8xf32>
    %71 = arith.subf %67, %70 : vector<1x8x8xf32>
    %72 = math.exp %71 : vector<1x8x8xf32>
    %cst_26 = arith.constant dense<0.000000e+00> : vector<1x8xf32>
    %73 = vector.multi_reduction <add>, %72, %cst_26 [2] : vector<1x8x8xf32> to vector<1x8xf32>
    %74 = vector.shape_cast %73 : vector<1x8xf32> to vector<1x8x1xf32>
    %75 = tpu.reciprocal %74 {approx = true} : vector<1x8x1xf32> -> vector<1x8x1xf32>
    %76 = vector.broadcast %75 : vector<1x8x1xf32> to vector<1x8x8xf32>
    %77 = arith.mulf %72, %76 : vector<1x8x8xf32>
    %78 = vector.shape_cast %77 : vector<1x8x8xf32> to vector<1x1x64xf32>
    %79 = arith.truncf %77 : vector<1x8x8xf32> to vector<1x8x8xbf16>
    "tpu.trace_start"() <{level = 10 : i32, message = "bqk,bkd->bqd"}> : () -> ()
    %cst_27 = arith.constant dense<0.000000e+00> : vector<1x8x8xf32>
    %80 = tpu.matmul %79, %66, %cst_27 {dimension_numbers = #tpu.dot_dimension_numbers<[2], [1], [1], [2], [0, 0, 0, 1, 1, 2], [0], [0]>} : vector<1x8x8xbf16>, vector<1x8x8xbf16>, vector<1x8x8xf32> -> vector<1x8x8xf32>
    "tpu.trace_stop"() : () -> ()
    %81 = vector.extract_strided_slice %42 {offsets = [0, 0, 16], sizes = [1, 8, 8], strides = [1, 1, 1]} : vector<1x8x32xbf16> to vector<1x8x8xbf16>
    %82 = vector.extract_strided_slice %44 {offsets = [0, 0, 16], sizes = [1, 8, 8], strides = [1, 1, 1]} : vector<1x8x32xbf16> to vector<1x8x8xbf16>
    %83 = vector.extract_strided_slice %46 {offsets = [0, 0, 16], sizes = [1, 8, 8], strides = [1, 1, 1]} : vector<1x8x32xbf16> to vector<1x8x8xbf16>
    "tpu.trace_start"() <{level = 10 : i32, message = "bqd,bkd->bqk"}> : () -> ()
    %cst_28 = arith.constant dense<0.000000e+00> : vector<1x8x8xf32>
    %84 = tpu.matmul %81, %82, %cst_28 {dimension_numbers = #tpu.dot_dimension_numbers<[2], [2], [1], [1], [0, 0, 0, 1, 1, 1], [0], [0]>} : vector<1x8x8xbf16>, vector<1x8x8xbf16>, vector<1x8x8xf32> -> vector<1x8x8xf32>
    "tpu.trace_stop"() : () -> ()
    %cst_29 = arith.constant dense<0xFF800000> : vector<1x8xf32>
    %85 = vector.multi_reduction <maximumf>, %84, %cst_29 [2] : vector<1x8x8xf32> to vector<1x8xf32>
    %86 = vector.shape_cast %85 : vector<1x8xf32> to vector<1x8x1xf32>
    %87 = vector.broadcast %86 : vector<1x8x1xf32> to vector<1x8x8xf32>
    %88 = arith.subf %84, %87 : vector<1x8x8xf32>
    %89 = math.exp %88 : vector<1x8x8xf32>
    %cst_30 = arith.constant dense<0.000000e+00> : vector<1x8xf32>
    %90 = vector.multi_reduction <add>, %89, %cst_30 [2] : vector<1x8x8xf32> to vector<1x8xf32>
    %91 = vector.shape_cast %90 : vector<1x8xf32> to vector<1x8x1xf32>
    %92 = tpu.reciprocal %91 {approx = true} : vector<1x8x1xf32> -> vector<1x8x1xf32>
    %93 = vector.broadcast %92 : vector<1x8x1xf32> to vector<1x8x8xf32>
    %94 = arith.mulf %89, %93 : vector<1x8x8xf32>
    %95 = vector.shape_cast %94 : vector<1x8x8xf32> to vector<1x1x64xf32>
    %96 = arith.truncf %94 : vector<1x8x8xf32> to vector<1x8x8xbf16>
    "tpu.trace_start"() <{level = 10 : i32, message = "bqk,bkd->bqd"}> : () -> ()
    %cst_31 = arith.constant dense<0.000000e+00> : vector<1x8x8xf32>
    %97 = tpu.matmul %96, %83, %cst_31 {dimension_numbers = #tpu.dot_dimension_numbers<[2], [1], [1], [2], [0, 0, 0, 1, 1, 2], [0], [0]>} : vector<1x8x8xbf16>, vector<1x8x8xbf16>, vector<1x8x8xf32> -> vector<1x8x8xf32>
    "tpu.trace_stop"() : () -> ()
    %98 = vector.extract_strided_slice %42 {offsets = [0, 0, 24], sizes = [1, 8, 8], strides = [1, 1, 1]} : vector<1x8x32xbf16> to vector<1x8x8xbf16>
    %99 = vector.extract_strided_slice %44 {offsets = [0, 0, 24], sizes = [1, 8, 8], strides = [1, 1, 1]} : vector<1x8x32xbf16> to vector<1x8x8xbf16>
    %100 = vector.extract_strided_slice %46 {offsets = [0, 0, 24], sizes = [1, 8, 8], strides = [1, 1, 1]} : vector<1x8x32xbf16> to vector<1x8x8xbf16>
    "tpu.trace_start"() <{level = 10 : i32, message = "bqd,bkd->bqk"}> : () -> ()
    %cst_32 = arith.constant dense<0.000000e+00> : vector<1x8x8xf32>
    %101 = tpu.matmul %98, %99, %cst_32 {dimension_numbers = #tpu.dot_dimension_numbers<[2], [2], [1], [1], [0, 0, 0, 1, 1, 1], [0], [0]>} : vector<1x8x8xbf16>, vector<1x8x8xbf16>, vector<1x8x8xf32> -> vector<1x8x8xf32>
    "tpu.trace_stop"() : () -> ()
    %cst_33 = arith.constant dense<0xFF800000> : vector<1x8xf32>
    %102 = vector.multi_reduction <maximumf>, %101, %cst_33 [2] : vector<1x8x8xf32> to vector<1x8xf32>
    %103 = vector.shape_cast %102 : vector<1x8xf32> to vector<1x8x1xf32>
    %104 = vector.broadcast %103 : vector<1x8x1xf32> to vector<1x8x8xf32>
    %105 = arith.subf %101, %104 : vector<1x8x8xf32>
    %106 = math.exp %105 : vector<1x8x8xf32>
    %cst_34 = arith.constant dense<0.000000e+00> : vector<1x8xf32>
    %107 = vector.multi_reduction <add>, %106, %cst_34 [2] : vector<1x8x8xf32> to vector<1x8xf32>
    %108 = vector.shape_cast %107 : vector<1x8xf32> to vector<1x8x1xf32>
    %109 = tpu.reciprocal %108 {approx = true} : vector<1x8x1xf32> -> vector<1x8x1xf32>
    %110 = vector.broadcast %109 : vector<1x8x1xf32> to vector<1x8x8xf32>
    %111 = arith.mulf %106, %110 : vector<1x8x8xf32>
    %112 = vector.shape_cast %111 : vector<1x8x8xf32> to vector<1x1x64xf32>
    %113 = arith.truncf %111 : vector<1x8x8xf32> to vector<1x8x8xbf16>
    "tpu.trace_start"() <{level = 10 : i32, message = "bqk,bkd->bqd"}> : () -> ()
    %cst_35 = arith.constant dense<0.000000e+00> : vector<1x8x8xf32>
    %114 = tpu.matmul %113, %100, %cst_35 {dimension_numbers = #tpu.dot_dimension_numbers<[2], [1], [1], [2], [0, 0, 0, 1, 1, 2], [0], [0]>} : vector<1x8x8xbf16>, vector<1x8x8xbf16>, vector<1x8x8xf32> -> vector<1x8x8xf32>
    "tpu.trace_stop"() : () -> ()
    %115 = tpu.concatenate %61, %78, %95, %112 in 1 : vector<1x1x64xf32>, vector<1x1x64xf32>, vector<1x1x64xf32>, vector<1x1x64xf32> -> vector<1x4x64xf32>
    %c0_36 = arith.constant 0 : index
    %c0_37 = arith.constant 0 : index
    %c0_38 = arith.constant 0 : index
    %116 = vector.load %arg14[%c0_36, %c0_37, %c0_38] : memref<1x4x64xf32, #tpu.memory_space<vmem>>, vector<1x4x64xf32>
    tpu.vector_store %arg14[%c0_36, %c0_37, %c0_38], %115 {strides = array<i32>} : memref<1x4x64xf32, #tpu.memory_space<vmem>>, vector<1x4x64xf32>,
    %117 = tpu.concatenate %63, %80, %97, %114 in 2 : vector<1x8x8xf32>, vector<1x8x8xf32>, vector<1x8x8xf32>, vector<1x8x8xf32> -> vector<1x8x32xf32>
    %118 = vector.shape_cast %117 : vector<1x8x32xf32> to vector<8x32xf32>
    %119 = arith.truncf %118 : vector<8x32xf32> to vector<8x32xbf16>
    %c0_39 = arith.constant 0 : index
    %c0_40 = arith.constant 0 : index
    %120 = vector.load %arg11[%c0_39, %c0_40] : memref<32x32xbf16, #tpu.memory_space<vmem>>, vector<32x32xbf16>
    %cst_41 = arith.constant dense<0.000000e+00> : vector<8x32xf32>
    %121 = tpu.matmul %119, %120, %cst_41 {dimension_numbers = #tpu.dot_dimension_numbers<[1], [0], [0], [1], [0, 0, 1, 1], [], []>} : vector<8x32xbf16>, vector<32x32xbf16>, vector<8x32xf32> -> vector<8x32xf32>
    %c0_42 = arith.constant 0 : index
    %c0_43 = arith.constant 0 : index
    %122 = vector.load %arg12[%c0_42, %c0_43] : memref<1x32xf32, #tpu.memory_space<vmem>>, vector<1x32xf32>
    %123 = vector.broadcast %122 : vector<1x32xf32> to vector<8x32xf32>
    %124 = arith.addf %121, %123 : vector<8x32xf32>
    %125 = vector.shape_cast %124 : vector<8x32xf32> to vector<1x8x32xf32>
    %c0_44 = arith.constant 0 : index
    %c0_45 = arith.constant 0 : index
    %c0_46 = arith.constant 0 : index
    %126 = vector.load %arg13[%c0_44, %c0_45, %c0_46] : memref<1x8x32xf32, #tpu.memory_space<vmem>>, vector<1x8x32xf32>
    tpu.vector_store %arg13[%c0_44, %c0_45, %c0_46], %125 {strides = array<i32>} : memref<1x8x32xf32, #tpu.memory_space<vmem>>, vector<1x8x32xf32>,
    return
  }
  func.func @transform_0(%arg0: i32) -> i32 {
    %c0_i32 = arith.constant 0 : i32
    %c0_i32_0 = arith.constant 0 : i32
    return %c0_i32 : i32
  }
  func.func @transform_1(%arg0: i32) -> i32 {
    %c0_i32 = arith.constant 0 : i32
    %c0_i32_0 = arith.constant 0 : i32
    return %c0_i32 : i32
  }
  func.func @transform_2(%arg0: i32) -> (i32, i32, i32) {
    %c0_i32 = arith.constant 0 : i32
    %c0_i32_0 = arith.constant 0 : i32
    %c0_i32_1 = arith.constant 0 : i32
    return %arg0, %c0_i32, %c0_i32_0 : i32, i32, i32
  }
  func.func @transform_3(%arg0: i32) -> (i32, i32) {
    %c0_i32 = arith.constant 0 : i32
    %c0_i32_0 = arith.constant 0 : i32
    %c0_i32_1 = arith.constant 0 : i32
    return %c0_i32, %c0_i32_0 : i32, i32
  }
  func.func @transform_4(%arg0: i32) -> (i32, i32) {
    %c0_i32 = arith.constant 0 : i32
    %c0_i32_0 = arith.constant 0 : i32
    %c0_i32_1 = arith.constant 0 : i32
    return %c0_i32, %c0_i32_0 : i32, i32
  }
  func.func @transform_5(%arg0: i32) -> (i32, i32) {
    %c0_i32 = arith.constant 0 : i32
    %c0_i32_0 = arith.constant 0 : i32
    %c0_i32_1 = arith.constant 0 : i32
    return %c0_i32, %c0_i32_0 : i32, i32
  }
  func.func @transform_6(%arg0: i32) -> (i32, i32) {
    %c0_i32 = arith.constant 0 : i32
    %c0_i32_0 = arith.constant 0 : i32
    %c0_i32_1 = arith.constant 0 : i32
    return %c0_i32, %c0_i32_0 : i32, i32
  }
  func.func @transform_7(%arg0: i32) -> (i32, i32) {
    %c0_i32 = arith.constant 0 : i32
    %c0_i32_0 = arith.constant 0 : i32
    %c0_i32_1 = arith.constant 0 : i32
    return %c0_i32, %c0_i32_0 : i32, i32
  }
  func.func @transform_8(%arg0: i32) -> (i32, i32) {
    %c0_i32 = arith.constant 0 : i32
    %c0_i32_0 = arith.constant 0 : i32
    %c0_i32_1 = arith.constant 0 : i32
    return %c0_i32, %c0_i32_0 : i32, i32
  }
  func.func @transform_9(%arg0: i32) -> (i32, i32) {
    %c0_i32 = arith.constant 0 : i32
    %c0_i32_0 = arith.constant 0 : i32
    %c0_i32_1 = arith.constant 0 : i32
    return %c0_i32, %c0_i32_0 : i32, i32
  }
  func.func @transform_10(%arg0: i32) -> (i32, i32) {
    %c0_i32 = arith.constant 0 : i32
    %c0_i32_0 = arith.constant 0 : i32
    %c0_i32_1 = arith.constant 0 : i32
    return %c0_i32, %c0_i32_0 : i32, i32
  }
  func.func @transform_11(%arg0: i32) -> (i32, i32) {
    %c0_i32 = arith.constant 0 : i32
    %c0_i32_0 = arith.constant 0 : i32
    %c0_i32_1 = arith.constant 0 : i32
    return %c0_i32, %c0_i32_0 : i32, i32
  }
  func.func @transform_12(%arg0: i32) -> (i32, i32, i32) {
    %c0_i32 = arith.constant 0 : i32
    %c0_i32_0 = arith.constant 0 : i32
    %c0_i32_1 = arith.constant 0 : i32
    return %arg0, %c0_i32, %c0_i32_0 : i32, i32, i32
  }
  func.func @transform_13(%arg0: i32) -> (i32, i32, i32) {
    %c0_i32 = arith.constant 0 : i32
    %c0_i32_0 = arith.constant 0 : i32
    %c0_i32_1 = arith.constant 0 : i32
    return %arg0, %c0_i32, %c0_i32_0 : i32, i32, i32
  }
}

</mosaic_0001>

<llo_original>
// kernel: tpu_custom_call.1
$region0: #{tpu_custom_call.1}
  #allocation0 [shape = 'u32[]', space=smem, size = 0x4, offset = 0x4, fixed_abs, tag = 'smem constant byte address 0x4 - core index']
  #allocation1 [shape = 'u32[72,128]{1,0:T(1,128)}', space=vmem, size = 0x9000, scoped, tag = 'internal scratch']
  #allocation2 [shape = 'f32[1]{0:T(128)S(6)}', space=smem, size = 0x200, scoped, tag = 'scoped memory for tpu_custom_call.1']
  %s0 = inlined_call_operand.vmem [shape: f32[3], index: 0, kind: input, shape index: {}]
  %s1 = inlined_call_operand.<no memory space> [shape: f32[1], index: 1, kind: input, shape index: {}]
  %s2 = inlined_call_operand.hbm [shape: f32[2,8,32], index: 2, kind: input, shape index: {}]
  %s3 = inlined_call_operand.hbm [shape: f32[8,32], index: 3, kind: input, shape index: {}]
  %s4 = inlined_call_operand.hbm [shape: bf16[32,32], index: 4, kind: input, shape index: {}]
  %s5 = inlined_call_operand.vmem [shape: f32[1,32], index: 5, kind: input, shape index: {}]
  %s6 = inlined_call_operand.hbm [shape: bf16[32,32], index: 6, kind: input, shape index: {}]
  %s7 = inlined_call_operand.vmem [shape: f32[1,32], index: 7, kind: input, shape index: {}]
  %s8 = inlined_call_operand.hbm [shape: bf16[32,32], index: 8, kind: input, shape index: {}]
  %s9 = inlined_call_operand.vmem [shape: f32[1,32], index: 9, kind: input, shape index: {}]
  %s10 = inlined_call_operand.hbm [shape: bf16[32,32], index: 10, kind: input, shape index: {}]
  %s11 = inlined_call_operand.vmem [shape: f32[1,32], index: 11, kind: input, shape index: {}]
  %s12 = inlined_call_operand.hbm [shape: f32[2,8,32], index: 12, kind: output, shape index: {0}]
  %s13 = inlined_call_operand.hbm [shape: f32[2,4,64], index: 13, kind: output, shape index: {1}]
  %14 = xla_tuple %s12, %s13
  %s15 = sld [smem:[#allocation0]]
  $region117: #{tpu_custom_call.1} parent=0
    _
  %s17 = ssub.s32 1, %s15
  %s18 = scalar_select 0, %s17, %s15
  %19 = sst [smem:[#allocation2]] %s1
  $region1: #{tpu_custom_call.1} parent=0
    #allocation3 [shape = 'u8[512]{0}', space=smem, size = 0x200, scoped, tag = 'input window, operand 0, single buffered']
    #allocation4 [shape = 's32[2]{0}', space=sflag, size = 0x8, scoped, tag = 'scoped memory for tpu_custom_call.1']
    #allocation5 [shape = 's32[2]{0}', space=sflag, size = 0x8, scoped, tag = 'scoped memory for tpu_custom_call.1']
    #allocation6 [shape = 's32[2]{0}', space=sflag, size = 0x8, scoped, tag = 'scoped memory for tpu_custom_call.1']
    #allocation7 [shape = 'u8[8192]{0}', space=vmem, size = 0x2000, scoped, tag = 'input window, operand 2']
    #allocation8 [shape = 'u8[4096]{0}', space=vmem, size = 0x1000, scoped, tag = 'input window, operand 3, single buffered']
    #allocation9 [shape = 's32[1]{0}', space=sflag, size = 0x4, scoped, tag = 'scoped memory for tpu_custom_call.1']
    #allocation10 [shape = 'u8[8192]{0}', space=vmem, size = 0x2000, scoped, tag = 'input window, operand 4, single buffered']
    #allocation11 [shape = 'u8[8192]{0}', space=vmem, size = 0x2000, scoped, tag = 'input window, operand 6, single buffered']
    #allocation12 [shape = 's32[1]{0}', space=sflag, size = 0x4, scoped, tag = 'scoped memory for tpu_custom_call.1']
    #allocation13 [shape = 'u8[8192]{0}', space=vmem, size = 0x2000, scoped, tag = 'input window, operand 8, single buffered']
    #allocation14 [shape = 'u8[8192]{0}', space=vmem, size = 0x2000, scoped, tag = 'input window, operand 10, single buffered']
    #allocation15 [shape = 's32[1]{0}', space=sflag, size = 0x4, scoped, tag = 'scoped memory for tpu_custom_call.1']
    #allocation16 [shape = 'u8[8192]{0}', space=vmem, size = 0x2000, scoped, tag = 'output window, operand 0']
    #allocation17 [shape = 'u8[4096]{0}', space=vmem, size = 0x1000, scoped, tag = 'output window, operand 1']
    #allocation18 [shape = 's32[2]{0}', space=sflag, size = 0x8, scoped, tag = 'scoped memory for tpu_custom_call.1']
    %20 = vsyncpa [#allocation6], 0
    %21 = vsyncpa [#allocation4], 0
    %s22 = scalar_lea.sflag [#allocation4], 1
    %23 = vsyncpa %s22, 0
    %24 = vsyncpa [#allocation9], 0
    %25 = vsyncpa [#allocation12], 0
    %26 = vsyncpa [#allocation15], 0
    %27 = vsyncpa [#allocation5], 0
    %s28 = scalar_lea.sflag [#allocation5], 1
    %29 = vsyncpa %s28, 0
    %30 = vsyncpa [#allocation18], 0
    %s31 = scalar_lea.sflag [#allocation18], 1
    %32 = vsyncpa %s31, 0
    loop: start=0, step=1, limit=4
    $region2: #{tpu_custom_call.1} parent=1 // loop_pre_header
      _
    $region3: #{tpu_custom_call.1} parent=1 // loop_header
      %s34 = sphi 0, %s38
      %p35 = scmp.ge.s32.totalorder %s34, 4
      %s42 = sphi 0, %s42
      %s44 = sphi 0, %s42
      %s45 = sphi 0, %s44
      %s59 = sphi 0, %s45
      %s63 = sphi 0, %s63
      %s65 = sphi 0, %s63
      %s66 = sphi 0, %s65
      %s80 = sphi 0, %s66
      %s86 = sphi 0, %s88
      %s89 = sphi 0, %s86
      %s90 = sphi 0, %s89
      %s106 = sphi 0, %s90
      %s110 = sphi 0, %s110
      %s112 = sphi 0, %s110
      %s113 = sphi 0, %s112
      %s127 = sphi 0, %s113
      %s131 = sphi 0, %s131
      %s133 = sphi 0, %s131
      %s134 = sphi 0, %s133
      %s148 = sphi 0, %s134
      %s152 = sphi 0, %s152
      %s154 = sphi 0, %s152
      %s155 = sphi 0, %s154
      %s169 = sphi 0, %s155
      %s173 = sphi 0, %s173
      %s175 = sphi 0, %s173
      %s176 = sphi 0, %s175
      %s190 = sphi 0, %s176
      %s194 = sphi 0, %s194
      %s196 = sphi 0, %s194
      %s197 = sphi 0, %s196
      %s211 = sphi 0, %s197
      %s215 = sphi 0, %s215
      %s217 = sphi 0, %s215
      %s218 = sphi 0, %s217
      %s232 = sphi 0, %s218
      %s236 = sphi 0, %s236
      %s238 = sphi 0, %s236
      %s239 = sphi 0, %s238
      %s253 = sphi 0, %s239
      %s257 = sphi 0, %s257
      %s259 = sphi 0, %s257
      %s260 = sphi 0, %s259
      %s274 = sphi 0, %s260
      %s278 = sphi 0, %s278
      %s280 = sphi 0, %s278
      %s281 = sphi 0, %s280
      %s295 = sphi 0, %s281
      %s301 = sphi 0, %s303
      %s304 = sphi 0, %s301
      %s305 = sphi 0, %s304
      %s321 = sphi 0, %s305
      %s327 = sphi 0, %s329
      %s330 = sphi 0, %s327
      %s331 = sphi 0, %s330
      %s347 = sphi 0, %s331
    $region4: #{tpu_custom_call.1} parent=1 // loop_header_branch
      %37 = sbr.rel (%p35) target = $region8
    $region5: #{tpu_custom_call.1} parent=1 // loop_body
      %s39 = ssub.s32 %s34, 1
      %s40 = ssub.s32 %s34, 2
      %s41 = sadd.s32 %s34, 1
      %s43 = sadd.s32 %s42, 1
      %p46 = scmp.eq.s32.totalorder %s34, 1
      %p47 = scmp.ne.s32.totalorder %s42, %s44
      %p48 = scmp.eq.s32.totalorder %s34, 0
      %p49 = por %p47, %p48
      %p50 = scmp.ne.s32.totalorder %s42, %s44
      %p51 = scmp.eq.s32.totalorder %s39, 1
      %p52 = por %p50, %p51
      %p53 = scmp.ne.s32.totalorder %s44, %s45
      %p54 = scmp.eq.s32.totalorder %s39, 0
      %p55 = por %p53, %p54
      %p56 = scmp.ne.s32.totalorder %s44, %s45
      %p57 = scmp.eq.s32.totalorder %s40, 1
      %p58 = por %p56, %p57
      %p60 = scmp.ne.s32.totalorder %s45, %s59
      %p61 = scmp.eq.s32.totalorder %s40, 0
      %p62 = por %p60, %p61
      %s64 = sadd.s32 %s63, 1
      %p67 = scmp.eq.s32.totalorder %s34, 1
      %p68 = scmp.ne.s32.totalorder %s63, %s65
      %p69 = scmp.eq.s32.totalorder %s34, 0
      %p70 = por %p68, %p69
      %p71 = scmp.ne.s32.totalorder %s63, %s65
      %p72 = scmp.eq.s32.totalorder %s39, 1
      %p73 = por %p71, %p72
      %p74 = scmp.ne.s32.totalorder %s65, %s66
      %p75 = scmp.eq.s32.totalorder %s39, 0
      %p76 = por %p74, %p75
      %p77 = scmp.ne.s32.totalorder %s65, %s66
      %p78 = scmp.eq.s32.totalorder %s40, 1
      %p79 = por %p77, %p78
      %p81 = scmp.ne.s32.totalorder %s66, %s80
      %p82 = scmp.eq.s32.totalorder %s40, 0
      %p83 = por %p81, %p82
      %s84 = ssub.s32 %s34, %s41
      %p85 = scmp.eq.s32.totalorder %s84, 0
      %s87 = sadd.s32 %s86, 1
      %s88 = scalar_select %p85, %s86, %s87
      %p91 = pneg %p85
      %p92 = scmp.eq.s32.totalorder %s34, 1
      %p93 = por %p91, %p92
      %p94 = scmp.ne.s32.totalorder %s86, %s89
      %p95 = scmp.eq.s32.totalorder %s34, 0
      %p96 = por %p94, %p95
      %p97 = scmp.ne.s32.totalorder %s86, %s89
      %p98 = scmp.eq.s32.totalorder %s39, 1
      %p99 = por %p97, %p98
      %p100 = scmp.ne.s32.totalorder %s89, %s90
      %p101 = scmp.eq.s32.totalorder %s39, 0
      %p102 = por %p100, %p101
      %p103 = scmp.ne.s32.totalorder %s89, %s90
      %p104 = scmp.eq.s32.totalorder %s40, 1
      %p105 = por %p103, %p104
      %p107 = scmp.ne.s32.totalorder %s90, %s106
      %p108 = scmp.eq.s32.totalorder %s40, 0
      %p109 = por %p107, %p108
      %s111 = sadd.s32 %s110, 1
      %p114 = scmp.eq.s32.totalorder %s34, 1
      %p115 = scmp.ne.s32.totalorder %s110, %s112
      %p116 = scmp.eq.s32.totalorder %s34, 0
      %p117 = por %p115, %p116
      %p118 = scmp.ne.s32.totalorder %s110, %s112
      %p119 = scmp.eq.s32.totalorder %s39, 1
      %p120 = por %p118, %p119
      %p121 = scmp.ne.s32.totalorder %s112, %s113
      %p122 = scmp.eq.s32.totalorder %s39, 0
      %p123 = por %p121, %p122
      %p124 = scmp.ne.s32.totalorder %s112, %s113
      %p125 = scmp.eq.s32.totalorder %s40, 1
      %p126 = por %p124, %p125
      %p128 = scmp.ne.s32.totalorder %s113, %s127
      %p129 = scmp.eq.s32.totalorder %s40, 0
      %p130 = por %p128, %p129
      %s132 = sadd.s32 %s131, 1
      %p135 = scmp.eq.s32.totalorder %s34, 1
      %p136 = scmp.ne.s32.totalorder %s131, %s133
      %p137 = scmp.eq.s32.totalorder %s34, 0
      %p138 = por %p136, %p137
      %p139 = scmp.ne.s32.totalorder %s131, %s133
      %p140 = scmp.eq.s32.totalorder %s39, 1
      %p141 = por %p139, %p140
      %p142 = scmp.ne.s32.totalorder %s133, %s134
      %p143 = scmp.eq.s32.totalorder %s39, 0
      %p144 = por %p142, %p143
      %p145 = scmp.ne.s32.totalorder %s133, %s134
      %p146 = scmp.eq.s32.totalorder %s40, 1
      %p147 = por %p145, %p146
      %p149 = scmp.ne.s32.totalorder %s134, %s148
      %p150 = scmp.eq.s32.totalorder %s40, 0
      %p151 = por %p149, %p150
      %s153 = sadd.s32 %s152, 1
      %p156 = scmp.eq.s32.totalorder %s34, 1
      %p157 = scmp.ne.s32.totalorder %s152, %s154
      %p158 = scmp.eq.s32.totalorder %s34, 0
      %p159 = por %p157, %p158
      %p160 = scmp.ne.s32.totalorder %s152, %s154
      %p161 = scmp.eq.s32.totalorder %s39, 1
      %p162 = por %p160, %p161
      %p163 = scmp.ne.s32.totalorder %s154, %s155
      %p164 = scmp.eq.s32.totalorder %s39, 0
      %p165 = por %p163, %p164
      %p166 = scmp.ne.s32.totalorder %s154, %s155
      %p167 = scmp.eq.s32.totalorder %s40, 1
      %p168 = por %p166, %p167
      %p170 = scmp.ne.s32.totalorder %s155, %s169
      %p171 = scmp.eq.s32.totalorder %s40, 0
      %p172 = por %p170, %p171
      %s174 = sadd.s32 %s173, 1
      %p177 = scmp.eq.s32.totalorder %s34, 1
      %p178 = scmp.ne.s32.totalorder %s173, %s175
      %p179 = scmp.eq.s32.totalorder %s34, 0
      %p180 = por %p178, %p179
      %p181 = scmp.ne.s32.totalorder %s173, %s175
      %p182 = scmp.eq.s32.totalorder %s39, 1
      %p183 = por %p181, %p182
      %p184 = scmp.ne.s32.totalorder %s175, %s176
      %p185 = scmp.eq.s32.totalorder %s39, 0
      %p186 = por %p184, %p185
      %p187 = scmp.ne.s32.totalorder %s175, %s176
      %p188 = scmp.eq.s32.totalorder %s40, 1
      %p189 = por %p187, %p188
      %p191 = scmp.ne.s32.totalorder %s176, %s190
      %p192 = scmp.eq.s32.totalorder %s40, 0
      %p193 = por %p191, %p192
      %s195 = sadd.s32 %s194, 1
      %p198 = scmp.eq.s32.totalorder %s34, 1
      %p199 = scmp.ne.s32.totalorder %s194, %s196
      %p200 = scmp.eq.s32.totalorder %s34, 0
      %p201 = por %p199, %p200
      %p202 = scmp.ne.s32.totalorder %s194, %s196
      %p203 = scmp.eq.s32.totalorder %s39, 1
      %p204 = por %p202, %p203
      %p205 = scmp.ne.s32.totalorder %s196, %s197
      %p206 = scmp.eq.s32.totalorder %s39, 0
      %p207 = por %p205, %p206
      %p208 = scmp.ne.s32.totalorder %s196, %s197
      %p209 = scmp.eq.s32.totalorder %s40, 1
      %p210 = por %p208, %p209
      %p212 = scmp.ne.s32.totalorder %s197, %s211
      %p213 = scmp.eq.s32.totalorder %s40, 0
      %p214 = por %p212, %p213
      %s216 = sadd.s32 %s215, 1
      %p219 = scmp.eq.s32.totalorder %s34, 1
      %p220 = scmp.ne.s32.totalorder %s215, %s217
      %p221 = scmp.eq.s32.totalorder %s34, 0
      %p222 = por %p220, %p221
      %p223 = scmp.ne.s32.totalorder %s215, %s217
      %p224 = scmp.eq.s32.totalorder %s39, 1
      %p225 = por %p223, %p224
      %p226 = scmp.ne.s32.totalorder %s217, %s218
      %p227 = scmp.eq.s32.totalorder %s39, 0
      %p228 = por %p226, %p227
      %p229 = scmp.ne.s32.totalorder %s217, %s218
      %p230 = scmp.eq.s32.totalorder %s40, 1
      %p231 = por %p229, %p230
      %p233 = scmp.ne.s32.totalorder %s218, %s232
      %p234 = scmp.eq.s32.totalorder %s40, 0
      %p235 = por %p233, %p234
      %s237 = sadd.s32 %s236, 1
      %p240 = scmp.eq.s32.totalorder %s34, 1
      %p241 = scmp.ne.s32.totalorder %s236, %s238
      %p242 = scmp.eq.s32.totalorder %s34, 0
      %p243 = por %p241, %p242
      %p244 = scmp.ne.s32.totalorder %s236, %s238
      %p245 = scmp.eq.s32.totalorder %s39, 1
      %p246 = por %p244, %p245
      %p247 = scmp.ne.s32.totalorder %s238, %s239
      %p248 = scmp.eq.s32.totalorder %s39, 0
      %p249 = por %p247, %p248
      %p250 = scmp.ne.s32.totalorder %s238, %s239
      %p251 = scmp.eq.s32.totalorder %s40, 1
      %p252 = por %p250, %p251
      %p254 = scmp.ne.s32.totalorder %s239, %s253
      %p255 = scmp.eq.s32.totalorder %s40, 0
      %p256 = por %p254, %p255
      %s258 = sadd.s32 %s257, 1
      %p261 = scmp.eq.s32.totalorder %s34, 1
      %p262 = scmp.ne.s32.totalorder %s257, %s259
      %p263 = scmp.eq.s32.totalorder %s34, 0
      %p264 = por %p262, %p263
      %p265 = scmp.ne.s32.totalorder %s257, %s259
      %p266 = scmp.eq.s32.totalorder %s39, 1
      %p267 = por %p265, %p266
      %p268 = scmp.ne.s32.totalorder %s259, %s260
      %p269 = scmp.eq.s32.totalorder %s39, 0
      %p270 = por %p268, %p269
      %p271 = scmp.ne.s32.totalorder %s259, %s260
      %p272 = scmp.eq.s32.totalorder %s40, 1
      %p273 = por %p271, %p272
      %p275 = scmp.ne.s32.totalorder %s260, %s274
      %p276 = scmp.eq.s32.totalorder %s40, 0
      %p277 = por %p275, %p276
      %s279 = sadd.s32 %s278, 1
      %p282 = scmp.eq.s32.totalorder %s34, 1
      %p283 = scmp.ne.s32.totalorder %s278, %s280
      %p284 = scmp.eq.s32.totalorder %s34, 0
      %p285 = por %p283, %p284
      %p286 = scmp.ne.s32.totalorder %s278, %s280
      %p287 = scmp.eq.s32.totalorder %s39, 1
      %p288 = por %p286, %p287
      %p289 = scmp.ne.s32.totalorder %s280, %s281
      %p290 = scmp.eq.s32.totalorder %s39, 0
      %p291 = por %p289, %p290
      %p292 = scmp.ne.s32.totalorder %s280, %s281
      %p293 = scmp.eq.s32.totalorder %s40, 1
      %p294 = por %p292, %p293
      %p296 = scmp.ne.s32.totalorder %s281, %s295
      %p297 = scmp.eq.s32.totalorder %s40, 0
      %p298 = por %p296, %p297
      %s299 = ssub.s32 %s34, %s41
      %p300 = scmp.eq.s32.totalorder %s299, 0
      %s302 = sadd.s32 %s301, 1
      %s303 = scalar_select %p300, %s301, %s302
      %p306 = pneg %p300
      %p307 = scmp.eq.s32.totalorder %s34, 1
      %p308 = por %p306, %p307
      %p309 = scmp.ne.s32.totalorder %s301, %s304
      %p310 = scmp.eq.s32.totalorder %s34, 0
      %p311 = por %p309, %p310
      %p312 = scmp.ne.s32.totalorder %s301, %s304
      %p313 = scmp.eq.s32.totalorder %s39, 1
      %p314 = por %p312, %p313
      %p315 = scmp.ne.s32.totalorder %s304, %s305
      %p316 = scmp.eq.s32.totalorder %s39, 0
      %p317 = por %p315, %p316
      %p318 = scmp.ne.s32.totalorder %s304, %s305
      %p319 = scmp.eq.s32.totalorder %s40, 1
      %p320 = por %p318, %p319
      %p322 = scmp.ne.s32.totalorder %s305, %s321
      %p323 = scmp.eq.s32.totalorder %s40, 0
      %p324 = por %p322, %p323
      %s325 = ssub.s32 %s34, %s41
      %p326 = scmp.eq.s32.totalorder %s325, 0
      %s328 = sadd.s32 %s327, 1
      %s329 = scalar_select %p326, %s327, %s328
      %p332 = pneg %p326
      %p333 = scmp.eq.s32.totalorder %s34, 1
      %p334 = por %p332, %p333
      %p335 = scmp.ne.s32.totalorder %s327, %s330
      %p336 = scmp.eq.s32.totalorder %s34, 0
      %p337 = por %p335, %p336
      %p338 = scmp.ne.s32.totalorder %s327, %s330
      %p339 = scmp.eq.s32.totalorder %s39, 1
      %p340 = por %p338, %p339
      %p341 = scmp.ne.s32.totalorder %s330, %s331
      %p342 = scmp.eq.s32.totalorder %s39, 0
      %p343 = por %p341, %p342
      %p344 = scmp.ne.s32.totalorder %s330, %s331
      %p345 = scmp.eq.s32.totalorder %s40, 1
      %p346 = por %p344, %p345
      %p348 = scmp.ne.s32.totalorder %s331, %s347
      %p349 = scmp.eq.s32.totalorder %s40, 0
      %p350 = por %p348, %p349
      %p351 = scmp.le.s32.totalorder 1, %s34
      %p352 = scmp.lt.s32.totalorder %s34, 3
      %p353 = pnand %p351, %p352
      %p354 = pneg %p353
      // Predicated region
      $region9: #{tpu_custom_call.1} parent=5 // pred_check
        _
      $region10: #{tpu_custom_call.1} parent=5 // pred_check_branch
        %356 = sbr.rel (%p353) target = $region12
      $region11: #{tpu_custom_call.1} parent=5 // pred_region
        %s357 = ssub.s32 %s34, 1
        // Predicated region
        $region13: #{tpu_custom_call.1} parent=11 // pred_check
          %p358 = pneg %p55
        $region14: #{tpu_custom_call.1} parent=11 // pred_check_branch
          %360 = sbr.rel (%p358) target = $region16
        $region15: #{tpu_custom_call.1} parent=11 // pred_region
          %362 = vsyncadd [#allocation6], 0
          %s364 = sshll.u32 %s0, 4
          %s365 = int_to_ptr.vmem [resolvable:$true] %s364
          %367 = dma.vmem_to_smem %s365, 16, [#allocation3], [#allocation6]
        $region16: #{tpu_custom_call.1} parent=11 // pred_fallthru
          _
        // Predicated region
        $region17: #{tpu_custom_call.1} parent=11 // pred_check
          %p368 = pneg %p76
        $region18: #{tpu_custom_call.1} parent=11 // pred_check_branch
          %370 = sbr.rel (%p368) target = $region20
        $region19: #{tpu_custom_call.1} parent=11 // pred_region
          _
        $region20: #{tpu_custom_call.1} parent=11 // pred_fallthru
          _
        // Predicated region
        $region21: #{tpu_custom_call.1} parent=11 // pred_check
          %p371 = pneg %p123
        $region22: #{tpu_custom_call.1} parent=11 // pred_check_branch
          %373 = sbr.rel (%p371) target = $region24
        $region23: #{tpu_custom_call.1} parent=11 // pred_region
          %375 = vsyncadd [#allocation9], 0
          %s377 = sshll.u32 %s3, 4
          %s378 = int_to_ptr.hbm [resolvable:$true] %s377
          %s379 = sshll.u32 [#allocation8], 4
          %s380 = int_to_ptr.vmem [resolvable:$true] %s379
          %382 = dma.hbm_to_vmem [thread:$0]  %s378, 128, %s380, [#allocation9]
        $region24: #{tpu_custom_call.1} parent=11 // pred_fallthru
          _
        // Predicated region
        $region25: #{tpu_custom_call.1} parent=11 // pred_check
          %p383 = pneg %p144
        $region26: #{tpu_custom_call.1} parent=11 // pred_check_branch
          %385 = sbr.rel (%p383) target = $region28
        $region27: #{tpu_custom_call.1} parent=11 // pred_region
          %387 = vsyncadd [#allocation9], 0
          %s388 = sshll.u32 %s4, 4
          %s389 = int_to_ptr.hbm [resolvable:$true] %s388
          %s390 = sshll.u32 [#allocation10], 4
          %s391 = int_to_ptr.vmem [resolvable:$true] %s390
          %396 = dma.hbm_to_vmem [thread:$0]  %s389, 256, %s391, [#allocation9], 64, 64, 4
        $region28: #{tpu_custom_call.1} parent=11 // pred_fallthru
          _
        // Predicated region
        $region29: #{tpu_custom_call.1} parent=11 // pred_check
          %p397 = pneg %p165
        $region30: #{tpu_custom_call.1} parent=11 // pred_check_branch
          %399 = sbr.rel (%p397) target = $region32
        $region31: #{tpu_custom_call.1} parent=11 // pred_region
          _
        $region32: #{tpu_custom_call.1} parent=11 // pred_fallthru
          _
        // Predicated region
        $region33: #{tpu_custom_call.1} parent=11 // pred_check
          %p400 = pneg %p186
        $region34: #{tpu_custom_call.1} parent=11 // pred_check_branch
          %402 = sbr.rel (%p400) target = $region36
        $region35: #{tpu_custom_call.1} parent=11 // pred_region
          %404 = vsyncadd [#allocation12], 0
          %s405 = sshll.u32 %s6, 4
          %s406 = int_to_ptr.hbm [resolvable:$true] %s405
          %s407 = sshll.u32 [#allocation11], 4
          %s408 = int_to_ptr.vmem [resolvable:$true] %s407
          %413 = dma.hbm_to_vmem [thread:$0]  %s406, 256, %s408, [#allocation12], 64, 64, 4
        $region36: #{tpu_custom_call.1} parent=11 // pred_fallthru
          _
        // Predicated region
        $region37: #{tpu_custom_call.1} parent=11 // pred_check
          %p414 = pneg %p207
        $region38: #{tpu_custom_call.1} parent=11 // pred_check_branch
          %416 = sbr.rel (%p414) target = $region40
        $region39: #{tpu_custom_call.1} parent=11 // pred_region
          _
        $region40: #{tpu_custom_call.1} parent=11 // pred_fallthru
          _
        // Predicated region
        $region41: #{tpu_custom_call.1} parent=11 // pred_check
          %p417 = pneg %p228
        $region42: #{tpu_custom_call.1} parent=11 // pred_check_branch
          %419 = sbr.rel (%p417) target = $region44
        $region43: #{tpu_custom_call.1} parent=11 // pred_region
          %421 = vsyncadd [#allocation12], 0
          %s422 = sshll.u32 %s8, 4
          %s423 = int_to_ptr.hbm [resolvable:$true] %s422
          %s424 = sshll.u32 [#allocation13], 4
          %s425 = int_to_ptr.vmem [resolvable:$true] %s424
          %430 = dma.hbm_to_vmem [thread:$0]  %s423, 256, %s425, [#allocation12], 64, 64, 4
        $region44: #{tpu_custom_call.1} parent=11 // pred_fallthru
          _
        // Predicated region
        $region45: #{tpu_custom_call.1} parent=11 // pred_check
          %p431 = pneg %p249
        $region46: #{tpu_custom_call.1} parent=11 // pred_check_branch
          %433 = sbr.rel (%p431) target = $region48
        $region47: #{tpu_custom_call.1} parent=11 // pred_region
          _
        $region48: #{tpu_custom_call.1} parent=11 // pred_fallthru
          _
        // Predicated region
        $region49: #{tpu_custom_call.1} parent=11 // pred_check
          %p434 = pneg %p270
        $region50: #{tpu_custom_call.1} parent=11 // pred_check_branch
          %436 = sbr.rel (%p434) target = $region52
        $region51: #{tpu_custom_call.1} parent=11 // pred_region
          %438 = vsyncadd [#allocation15], 0
          %s439 = sshll.u32 %s10, 4
          %s440 = int_to_ptr.hbm [resolvable:$true] %s439
          %s441 = sshll.u32 [#allocation14], 4
          %s442 = int_to_ptr.vmem [resolvable:$true] %s441
          %447 = dma.hbm_to_vmem [thread:$0]  %s440, 256, %s442, [#allocation15], 64, 64, 4
        $region52: #{tpu_custom_call.1} parent=11 // pred_fallthru
          _
        // Predicated region
        $region53: #{tpu_custom_call.1} parent=11 // pred_check
          %p448 = pneg %p291
        $region54: #{tpu_custom_call.1} parent=11 // pred_check_branch
          %450 = sbr.rel (%p448) target = $region56
        $region55: #{tpu_custom_call.1} parent=11 // pred_region
          _
        $region56: #{tpu_custom_call.1} parent=11 // pred_fallthru
          _
      $region12: #{tpu_custom_call.1} parent=5 // pred_fallthru
        _
      %p451 = scmp.lt.s32.totalorder %s34, 2
      // Predicated region
      $region57: #{tpu_custom_call.1} parent=5 // pred_check
        %p452 = pneg %p451
      $region58: #{tpu_custom_call.1} parent=5 // pred_check_branch
        %454 = sbr.rel (%p452) target = $region60
      $region59: #{tpu_custom_call.1} parent=5 // pred_region
        // Predicated region
        $region61: #{tpu_custom_call.1} parent=59 // pred_check
          %p455 = pneg %p96
        $region62: #{tpu_custom_call.1} parent=59 // pred_check_branch
          %457 = sbr.rel (%p455) target = $region64
        $region63: #{tpu_custom_call.1} parent=59 // pred_region
          %s458 = sand.u32 %s86, 1
          %s459 = scalar_lea.sflag [#allocation4], %s458
          %s460 = sand.u32 %s86, 1
          %s461 = smul.addr %s460, 8
          %s462 = scalar_lea.vmem [#allocation7], %s461
          %464 = vsyncadd %s459, 0
          %s465 = smul.addr %s34, 8
          %s466 = scalar_lea.hbm %s2, %s465
          %s468 = sshll.u32 %s466, 4
          %s469 = int_to_ptr.hbm [resolvable:$true] %s468
          %s470 = sshll.u32 %s462, 4
          %s471 = int_to_ptr.vmem [resolvable:$true] %s470
          %473 = dma.hbm_to_vmem [thread:$0]  %s469, 128, %s471, %s459
        $region64: #{tpu_custom_call.1} parent=59 // pred_fallthru
          _
      $region60: #{tpu_custom_call.1} parent=5 // pred_fallthru
        _
      %p474 = scmp.le.s32.totalorder 1, %s34
      %p475 = scmp.lt.s32.totalorder %s34, 3
      %p476 = pnand %p474, %p475
      %p477 = pneg %p476
      // Predicated region
      $region65: #{tpu_custom_call.1} parent=5 // pred_check
        _
      $region66: #{tpu_custom_call.1} parent=5 // pred_check_branch
        %479 = sbr.rel (%p476) target = $region68
      $region67: #{tpu_custom_call.1} parent=5 // pred_region
        %s480 = ssub.s32 %s34, 1
        // Predicated region
        $region69: #{tpu_custom_call.1} parent=67 // pred_check
          %p481 = pneg %p55
        $region70: #{tpu_custom_call.1} parent=67 // pred_check_branch
          %483 = sbr.rel (%p481) target = $region72
        $region71: #{tpu_custom_call.1} parent=67 // pred_region
          %485 = dma.done [#allocation6], 16
        $region72: #{tpu_custom_call.1} parent=67 // pred_fallthru
          _
        %s486 = sand.u32 %s89, 1
        %s487 = scalar_lea.sflag [#allocation4], %s486
        %s488 = sand.u32 %s89, 1
        %s489 = smul.addr %s488, 8
        %s490 = scalar_lea.vmem [#allocation7], %s489
        // Predicated region
        $region73: #{tpu_custom_call.1} parent=67 // pred_check
          %p491 = pneg %p102
        $region74: #{tpu_custom_call.1} parent=67 // pred_check_branch
          %493 = sbr.rel (%p491) target = $region76
        $region75: #{tpu_custom_call.1} parent=67 // pred_region
          %495 = dma.done %s487, 128
        $region76: #{tpu_custom_call.1} parent=67 // pred_fallthru
          _
        // Predicated region
        $region77: #{tpu_custom_call.1} parent=67 // pred_check
          %p496 = pneg %p123
        $region78: #{tpu_custom_call.1} parent=67 // pred_check_branch
          %498 = sbr.rel (%p496) target = $region80
        $region79: #{tpu_custom_call.1} parent=67 // pred_region
          %500 = dma.done [#allocation9], 128
        $region80: #{tpu_custom_call.1} parent=67 // pred_fallthru
          _
        // Predicated region
        $region81: #{tpu_custom_call.1} parent=67 // pred_check
          %p501 = pneg %p144
        $region82: #{tpu_custom_call.1} parent=67 // pred_check_branch
          %503 = sbr.rel (%p501) target = $region84
        $region83: #{tpu_custom_call.1} parent=67 // pred_region
          %505 = dma.done [#allocation9], 256
        $region84: #{tpu_custom_call.1} parent=67 // pred_fallthru
          _
        // Predicated region
        $region85: #{tpu_custom_call.1} parent=67 // pred_check
          %p506 = pneg %p186
        $region86: #{tpu_custom_call.1} parent=67 // pred_check_branch
          %508 = sbr.rel (%p506) target = $region88
        $region87: #{tpu_custom_call.1} parent=67 // pred_region
          %510 = dma.done [#allocation12], 256
        $region88: #{tpu_custom_call.1} parent=67 // pred_fallthru
          _
        // Predicated region
        $region89: #{tpu_custom_call.1} parent=67 // pred_check
          %p511 = pneg %p228
        $region90: #{tpu_custom_call.1} parent=67 // pred_check_branch
          %513 = sbr.rel (%p511) target = $region92
        $region91: #{tpu_custom_call.1} parent=67 // pred_region
          %515 = dma.done [#allocation12], 256
        $region92: #{tpu_custom_call.1} parent=67 // pred_fallthru
          _
        // Predicated region
        $region93: #{tpu_custom_call.1} parent=67 // pred_check
          %p516 = pneg %p270
        $region94: #{tpu_custom_call.1} parent=67 // pred_check_branch
          %518 = sbr.rel (%p516) target = $region96
        $region95: #{tpu_custom_call.1} parent=67 // pred_region
          %520 = dma.done [#allocation15], 256
        $region96: #{tpu_custom_call.1} parent=67 // pred_fallthru
          _
        %521 = sfence
        %p522 = pneg %p55
        %p523 = pneg %p52
        %p524 = pneg %p76
        %p525 = pneg %p73
        %s526 = sand.u32 %s89, 1
        %s527 = scalar_lea.sflag [#allocation4], %s526
        %s528 = sand.u32 %s89, 1
        %s529 = smul.addr %s528, 8
        %s530 = scalar_lea.vmem [#allocation7], %s529
        %p531 = pneg %p102
        %p532 = pneg %p99
        %p533 = pneg %p123
        %p534 = pneg %p120
        %p535 = pneg %p144
        %p536 = pneg %p141
        %p537 = pneg %p165
        %p538 = pneg %p162
        %p539 = pneg %p186
        %p540 = pneg %p183
        %p541 = pneg %p207
        %p542 = pneg %p204
        %p543 = pneg %p228
        %p544 = pneg %p225
        %p545 = pneg %p249
        %p546 = pneg %p246
        %p547 = pneg %p270
        %p548 = pneg %p267
        %p549 = pneg %p291
        %p550 = pneg %p288
        %p551 = pneg %p317
        %p552 = pneg %p314
        %s553 = sand.u32 %s304, 1
        %s554 = scalar_lea.sflag [#allocation5], %s553
        %s555 = sand.u32 %s304, 1
        %s556 = smul.addr %s555, 8
        %s557 = scalar_lea.vmem [#allocation16], %s556
        %p558 = pneg %p343
        %p559 = pneg %p340
        %s560 = sand.u32 %s330, 1
        %s561 = scalar_lea.sflag [#allocation18], %s560
        %s562 = sand.u32 %s330, 1
        %s563 = smul.addr %s562, 4
        %s564 = scalar_lea.vmem [#allocation17], %s563
        %v566 = vld [vmem:[#allocation8] sm:$0xff]
        %s567 = sld [smem:[#allocation2]]
        %v568 = vld [vmem:[%s490] sm:$0xff]
        %s569 = sld [smem:[#allocation3]]
        %v570 = vstv %s569
        %v571 = vmul.f32 %v570, %v566
        %v572 = vadd.f32 %v568, %v571
        %v573 = vpack.c.bf16 %v572, %v572
        %s574 = sld [smem:[#allocation3 + $0x1]]
        %v575 = vstv %s574
        %v576 = vmul.f32 %v575, %v566
        %v577 = vadd.f32 %v568, %v576
        %v578 = vpack.c.bf16 %v577, %v577
        %s579 = sld [smem:[#allocation3 + $0x2]]
        %v580 = vstv %s579
        %v581 = vmul.f32 %v580, %v566
        %v582 = vadd.f32 %v568, %v581
        %v583 = vpack.c.bf16 %v582, %v582
        %v584 = vld [vmem:[#allocation10] sm:$0xf]
        %v585 = vld [vmem:[#allocation10 + $0x4] sm:$0xf]
        %v586 = vld [vmem:[#allocation10 + $0x8] sm:$0xf]
        %v587 = vld [vmem:[#allocation10 + $0xc] sm:$0xf]
        %v588 = vld [vmem:[%s5] sm:$0x1]
        %v590 = vperm.slane %v588, 0
        %v596 = vunpack.c.l.b16 %v584
        %v597 = vunpack.c.l.b16 %v585
        %v598 = vunpack.c.l.b16 %v586
        %v599 = vunpack.c.l.b16 %v587
        %v600 = vpack.c.b16 %v597, %v596
        %v601 = vpack.c.b16 %v599, %v598
        %vm604 = vcmask 261120
        %v606 = vsel %vm604, %v573, 0
        %608 = vmatpush.bf16.msra.mxu0 0
        %609 = vmatpush.bf16.msra.mxu0 0
        %610 = vmatpush.bf16.msra.mxu0 0
        %611 = vmatpush.bf16.msra.mxu0 0
        %612 = vmatpush.bf16.msra.mxu0 0
        %613 = vmatpush.bf16.msra.mxu0 0
        %614 = vmatpush.bf16.msra.mxu0 %v601
        %615 = vmatpush.bf16.msra.mxu0 %v600
        %616 = vmatmul.bf16.gmra.mxu0 %v606
        %v617 = vpop.f32.mrf.mxu0
        %v618 = vadd.f32 %v590, %v617
        %v619 = vpop.f32.mrf.mxu0
        %620 = vdwg.mxu0
        %v621 = vstv %s567
        %v622 = vmul.f32 %v618, %v621
        %v623 = vld [vmem:[#allocation11] sm:$0xf]
        %v624 = vld [vmem:[#allocation11 + $0x4] sm:$0xf]
        %v625 = vld [vmem:[#allocation11 + $0x8] sm:$0xf]
        %v626 = vld [vmem:[#allocation11 + $0xc] sm:$0xf]
        %v627 = vld [vmem:[%s7] sm:$0x1]
        %v629 = vperm.slane %v627, 0
        %v635 = vunpack.c.l.b16 %v623
        %v636 = vunpack.c.l.b16 %v624
        %v637 = vunpack.c.l.b16 %v625
        %v638 = vunpack.c.l.b16 %v626
        %v639 = vpack.c.b16 %v636, %v635
        %v640 = vpack.c.b16 %v638, %v637
        %v644 = vsel %vm604, %v578, 0
        %646 = vmatpush.bf16.msra.mxu0 0
        %647 = vmatpush.bf16.msra.mxu0 0
        %648 = vmatpush.bf16.msra.mxu0 0
        %649 = vmatpush.bf16.msra.mxu0 0
        %650 = vmatpush.bf16.msra.mxu0 0
        %651 = vmatpush.bf16.msra.mxu0 0
        %652 = vmatpush.bf16.msra.mxu0 %v640
        %653 = vmatpush.bf16.msra.mxu0 %v639
        %654 = vmatmul.bf16.gmra.mxu0 %v644
        %v655 = vpop.f32.mrf.mxu0
        %v656 = vadd.f32 %v629, %v655
        %v657 = vpop.f32.mrf.mxu0
        %658 = vdwg.mxu0
        %v659 = vld [vmem:[#allocation13] sm:$0xf]
        %v660 = vld [vmem:[#allocation13 + $0x4] sm:$0xf]
        %v661 = vld [vmem:[#allocation13 + $0x8] sm:$0xf]
        %v662 = vld [vmem:[#allocation13 + $0xc] sm:$0xf]
        %v663 = vld [vmem:[%s9] sm:$0x1]
        %v665 = vperm.slane %v663, 0
        %v671 = vunpack.c.l.b16 %v659
        %v672 = vunpack.c.l.b16 %v660
        %v673 = vunpack.c.l.b16 %v661
        %v674 = vunpack.c.l.b16 %v662
        %v675 = vpack.c.b16 %v672, %v671
        %v676 = vpack.c.b16 %v674, %v673
        %v680 = vsel %vm604, %v583, 0
        %682 = vmatpush.bf16.msra.mxu0 0
        %683 = vmatpush.bf16.msra.mxu0 0
        %684 = vmatpush.bf16.msra.mxu0 0
        %685 = vmatpush.bf16.msra.mxu0 0
        %686 = vmatpush.bf16.msra.mxu0 0
        %687 = vmatpush.bf16.msra.mxu0 0
        %688 = vmatpush.bf16.msra.mxu0 %v676
        %689 = vmatpush.bf16.msra.mxu0 %v675
        %690 = vmatmul.bf16.gmra.mxu0 %v680
        %v691 = vpop.f32.mrf.mxu0
        %v692 = vadd.f32 %v665, %v691
        %v693 = vpop.f32.mrf.mxu0
        %694 = vdwg.mxu0
        %v695 = vpack.c.bf16 %v622, %v622
        %v696 = vpack.c.bf16 %v656, %v656
        %v697 = vpack.c.bf16 %v692, %v692
        %vm698 = vcmask 64512
        %v700 = vsel %vm698, %v695, 0
        %v703 = vsel %vm698, %v696, 0
        %705 = vmatpush.bf16.xpose.msra.mxu0 0
        %706 = vmatpush.bf16.xpose.msra.mxu0 0
        %707 = vmatpush.bf16.xpose.msra.mxu0 0
        %708 = vmatpush.bf16.xpose.msra.mxu0 0
        %709 = vmatpush.bf16.xpose.msra.mxu0 0
        %710 = vmatpush.bf16.xpose.msra.mxu0 0
        %711 = vmatpush.bf16.xpose.msra.mxu0 0
        %712 = vmatpush.bf16.xpose.msra.mxu0 %v703
        %713 = vmatmul.bf16.gmra.mxu0 %v700
        %v714 = vpop.f32.mrf.mxu0
        %v715 = vadd.f32 0.0, %v714
        %v716 = vpop.f32.mrf.mxu0
        %717 = vdwg.mxu0
        %v718 = vsel %vm698, %v715, -inf
        %719 = vmax.xlane.f32.xlu0 %v718
        %v720 = vpop.xlane.xlu0 %719
        %v721 = vsub.f32 %v715, %v720
        %v722 = vmul.f32 %v721, 1.442695
        %v723 = vpow.pop %v722
        %v724 = vsel %vm698, %v723, 0.0
        %725 = vadd.xlane.f32.xlu0 %v724
        %v726 = vpop.xlane.xlu0 %725
        %v727 = vrcp.pop %v726
        %v728 = vmul.f32 %v723, %v727
        %v729 = vrot.slane %v728, 4
        %vm730 = vcmask 1047556
        %v731 = vsel %vm730, 0.0, %v729
        %v733 = vunpack.c.l.s4 1983009808
        %v734 = vunpack.c.0.s8 %v733
        %v735 = vperm.slane %v728, %v734
        %v737 = vunpack.c.l.s4 1983009808
        %v738 = vunpack.c.0.s8 %v737
        %v739 = vperm.slane %v731, %v738
        %v740 = vrot.slane %v735, 4
        %v741 = vsel %vm730, 0.0, %v740
        %v743 = vunpack.c.l.s4 1934713408
        %v744 = vunpack.c.0.s8 %v743
        %v745 = vperm.slane %v735, %v744
        %v747 = vunpack.c.l.s4 1934713408
        %v748 = vunpack.c.0.s8 %v747
        %v749 = vperm.slane %v741, %v748
        %v750 = vrot.slane %v739, 4
        %v751 = vsel %vm730, 0.0, %v750
        %v753 = vunpack.c.l.s4 1934713408
        %v754 = vunpack.c.0.s8 %v753
        %v755 = vperm.slane %v739, %v754
        %v757 = vunpack.c.l.s4 1934713408
        %v758 = vunpack.c.0.s8 %v757
        %v759 = vperm.slane %v751, %v758
        %v760 = vrot.slane %v745, 4
        %v761 = vsel %vm730, 0.0, %v760
        %v762 = vrot.slane %v749, 4
        %v763 = vsel %vm730, 0.0, %v762
        %v764 = vrot.slane %v755, 4
        %v765 = vsel %vm730, 0.0, %v764
        %v766 = vrot.slane %v759, 4
        %v767 = vsel %vm730, 0.0, %v766
        %769 = vrot.lane.b32.xlu0 %v761, 8
        %v770 = vpop.permute.xlu0 %769
        %773 = vrot.lane.b32.xlu0 %v749, 16
        %v774 = vpop.permute.xlu0 %773
        %777 = vrot.lane.b32.xlu0 %v763, 24
        %v778 = vpop.permute.xlu0 %777
        %781 = vrot.lane.b32.xlu0 %v755, 32
        %v782 = vpop.permute.xlu0 %781
        %785 = vrot.lane.b32.xlu0 %v765, 40
        %v786 = vpop.permute.xlu0 %785
        %789 = vrot.lane.b32.xlu0 %v759, 48
        %v790 = vpop.permute.xlu0 %789
        %793 = vrot.lane.b32.xlu0 %v767, 56
        %v794 = vpop.permute.xlu0 %793
        %v796 = vsel %vm698, %v745, %v770
        %vm797 = vcmask 130048
        %v798 = vsel %vm797, %v796, %v774
        %vm799 = vcmask 195584
        %v800 = vsel %vm799, %v798, %v778
        %v801 = vsel %vm604, %v800, %v782
        %vm802 = vcmask 326656
        %v803 = vsel %vm802, %v801, %v786
        %vm804 = vcmask 392192
        %v805 = vsel %vm804, %v803, %v790
        %vm806 = vcmask 457728
        %v807 = vsel %vm806, %v805, %v794
        %v808 = vpack.c.bf16 %v728, %v728
        %v810 = vsel %vm698, %v808, 0
        %vm812 = vcmask 1043456
        %v814 = vsel %vm812, %v697, 0
        %816 = vmatpush.bf16.msra.mxu0 0
        %817 = vmatpush.bf16.msra.mxu0 0
        %818 = vmatpush.bf16.msra.mxu0 0
        %819 = vmatpush.bf16.msra.mxu0 0
        %820 = vmatpush.bf16.msra.mxu0 0
        %821 = vmatpush.bf16.msra.mxu0 0
        %822 = vmatpush.bf16.msra.mxu0 0
        %823 = vmatpush.bf16.msra.mxu0 %v814
        %824 = vmatmul.bf16.gmra.mxu0 %v810
        %v825 = vpop.f32.mrf.mxu0
        %v826 = vadd.f32 0.0, %v825
        %v827 = vpop.f32.mrf.mxu0
        %828 = vdwg.mxu0
        %v830 = vunpack.c.l.b16 %v695
        %v831 = vpack.c.b16 %v830, %v830
        %832 = vrot.lane.b32.xlu0 %v831, 120
        %v833 = vpop.permute.xlu0 %832
        %v835 = vunpack.c.l.b16 %v696
        %v836 = vpack.c.b16 %v835, %v835
        %837 = vrot.lane.b32.xlu0 %v836, 120
        %v838 = vpop.permute.xlu0 %837
        %v840 = vsel %vm698, %v833, 0
        %v843 = vsel %vm698, %v838, 0
        %845 = vmatpush.bf16.xpose.msra.mxu0 0
        %846 = vmatpush.bf16.xpose.msra.mxu0 0
        %847 = vmatpush.bf16.xpose.msra.mxu0 0
        %848 = vmatpush.bf16.xpose.msra.mxu0 0
        %849 = vmatpush.bf16.xpose.msra.mxu0 0
        %850 = vmatpush.bf16.xpose.msra.mxu0 0
        %851 = vmatpush.bf16.xpose.msra.mxu0 0
        %852 = vmatpush.bf16.xpose.msra.mxu0 %v843
        %853 = vmatmul.bf16.gmra.mxu0 %v840
        %v854 = vpop.f32.mrf.mxu0
        %v855 = vadd.f32 0.0, %v854
        %v856 = vpop.f32.mrf.mxu0
        %857 = vdwg.mxu0
        %v858 = vsel %vm698, %v855, -inf
        %859 = vmax.xlane.f32.xlu0 %v858
        %v860 = vpop.xlane.xlu0 %859
        %v861 = vsub.f32 %v855, %v860
        %v862 = vmul.f32 %v861, 1.442695
        %v863 = vpow.pop %v862
        %v864 = vsel %vm698, %v863, 0.0
        %865 = vadd.xlane.f32.xlu0 %v864
        %v866 = vpop.xlane.xlu0 %865
        %v867 = vrcp.pop %v866
        %v868 = vmul.f32 %v863, %v867
        %v869 = vrot.slane %v868, 4
        %v870 = vsel %vm730, 0.0, %v869
        %v872 = vunpack.c.l.s4 1983009808
        %v873 = vunpack.c.0.s8 %v872
        %v874 = vperm.slane %v868, %v873
        %v876 = vunpack.c.l.s4 1983009808
        %v877 = vunpack.c.0.s8 %v876
        %v878 = vperm.slane %v870, %v877
        %v879 = vrot.slane %v874, 4
        %v880 = vsel %vm730, 0.0, %v879
        %v882 = vunpack.c.l.s4 1934713408
        %v883 = vunpack.c.0.s8 %v882
        %v884 = vperm.slane %v874, %v883
        %v886 = vunpack.c.l.s4 1934713408
        %v887 = vunpack.c.0.s8 %v886
        %v888 = vperm.slane %v880, %v887
        %v889 = vrot.slane %v878, 4
        %v890 = vsel %vm730, 0.0, %v889
        %v892 = vunpack.c.l.s4 1934713408
        %v893 = vunpack.c.0.s8 %v892
        %v894 = vperm.slane %v878, %v893
        %v896 = vunpack.c.l.s4 1934713408
        %v897 = vunpack.c.0.s8 %v896
        %v898 = vperm.slane %v890, %v897
        %v899 = vrot.slane %v884, 4
        %v900 = vsel %vm730, 0.0, %v899
        %v901 = vrot.slane %v888, 4
        %v902 = vsel %vm730, 0.0, %v901
        %v903 = vrot.slane %v894, 4
        %v904 = vsel %vm730, 0.0, %v903
        %v905 = vrot.slane %v898, 4
        %v906 = vsel %vm730, 0.0, %v905
        %908 = vrot.lane.b32.xlu0 %v900, 8
        %v909 = vpop.permute.xlu0 %908
        %912 = vrot.lane.b32.xlu0 %v888, 16
        %v913 = vpop.permute.xlu0 %912
        %916 = vrot.lane.b32.xlu0 %v902, 24
        %v917 = vpop.permute.xlu0 %916
        %920 = vrot.lane.b32.xlu0 %v894, 32
        %v921 = vpop.permute.xlu0 %920
        %924 = vrot.lane.b32.xlu0 %v904, 40
        %v925 = vpop.permute.xlu0 %924
        %928 = vrot.lane.b32.xlu0 %v898, 48
        %v929 = vpop.permute.xlu0 %928
        %932 = vrot.lane.b32.xlu0 %v906, 56
        %v933 = vpop.permute.xlu0 %932
        %v935 = vsel %vm698, %v884, %v909
        %v936 = vsel %vm797, %v935, %v913
        %v937 = vsel %vm799, %v936, %v917
        %v938 = vsel %vm604, %v937, %v921
        %v939 = vsel %vm802, %v938, %v925
        %v940 = vsel %vm804, %v939, %v929
        %v941 = vsel %vm806, %v940, %v933
        %v942 = vpack.c.bf16 %v868, %v868
        %v944 = vunpack.c.l.b16 %v697
        %v945 = vpack.c.b16 %v944, %v944
        %946 = vrot.lane.b32.xlu0 %v945, 120
        %v947 = vpop.permute.xlu0 %946
        %v949 = vsel %vm698, %v942, 0
        %v952 = vsel %vm812, %v947, 0
        %954 = vmatpush.bf16.msra.mxu0 0
        %955 = vmatpush.bf16.msra.mxu0 0
        %956 = vmatpush.bf16.msra.mxu0 0
        %957 = vmatpush.bf16.msra.mxu0 0
        %958 = vmatpush.bf16.msra.mxu0 0
        %959 = vmatpush.bf16.msra.mxu0 0
        %960 = vmatpush.bf16.msra.mxu0 0
        %961 = vmatpush.bf16.msra.mxu0 %v952
        %962 = vmatmul.bf16.gmra.mxu0 %v949
        %v963 = vpop.f32.mrf.mxu0
        %v964 = vadd.f32 0.0, %v963
        %v965 = vpop.f32.mrf.mxu0
        %966 = vdwg.mxu0
        %967 = vrot.lane.b32.xlu0 %v831, 112
        %v968 = vpop.permute.xlu0 %967
        %969 = vrot.lane.b32.xlu0 %v836, 112
        %v970 = vpop.permute.xlu0 %969
        %v972 = vsel %vm698, %v968, 0
        %v975 = vsel %vm698, %v970, 0
        %977 = vmatpush.bf16.xpose.msra.mxu0 0
        %978 = vmatpush.bf16.xpose.msra.mxu0 0
        %979 = vmatpush.bf16.xpose.msra.mxu0 0
        %980 = vmatpush.bf16.xpose.msra.mxu0 0
        %981 = vmatpush.bf16.xpose.msra.mxu0 0
        %982 = vmatpush.bf16.xpose.msra.mxu0 0
        %983 = vmatpush.bf16.xpose.msra.mxu0 0
        %984 = vmatpush.bf16.xpose.msra.mxu0 %v975
        %985 = vmatmul.bf16.gmra.mxu0 %v972
        %v986 = vpop.f32.mrf.mxu0
        %v987 = vadd.f32 0.0, %v986
        %v988 = vpop.f32.mrf.mxu0
        %989 = vdwg.mxu0
        %v990 = vsel %vm698, %v987, -inf
        %991 = vmax.xlane.f32.xlu0 %v990
        %v992 = vpop.xlane.xlu0 %991
        %v993 = vsub.f32 %v987, %v992
        %v994 = vmul.f32 %v993, 1.442695
        %v995 = vpow.pop %v994
        %v996 = vsel %vm698, %v995, 0.0
        %997 = vadd.xlane.f32.xlu0 %v996
        %v998 = vpop.xlane.xlu0 %997
        %v999 = vrcp.pop %v998
        %v1000 = vmul.f32 %v995, %v999
        %v1001 = vrot.slane %v1000, 4
        %v1002 = vsel %vm730, 0.0, %v1001
        %v1004 = vunpack.c.l.s4 1983009808
        %v1005 = vunpack.c.0.s8 %v1004
        %v1006 = vperm.slane %v1000, %v1005
        %v1008 = vunpack.c.l.s4 1983009808
        %v1009 = vunpack.c.0.s8 %v1008
        %v1010 = vperm.slane %v1002, %v1009
        %v1011 = vrot.slane %v1006, 4
        %v1012 = vsel %vm730, 0.0, %v1011
        %v1014 = vunpack.c.l.s4 1934713408
        %v1015 = vunpack.c.0.s8 %v1014
        %v1016 = vperm.slane %v1006, %v1015
        %v1018 = vunpack.c.l.s4 1934713408
        %v1019 = vunpack.c.0.s8 %v1018
        %v1020 = vperm.slane %v1012, %v1019
        %v1021 = vrot.slane %v1010, 4
        %v1022 = vsel %vm730, 0.0, %v1021
        %v1024 = vunpack.c.l.s4 1934713408
        %v1025 = vunpack.c.0.s8 %v1024
        %v1026 = vperm.slane %v1010, %v1025
        %v1028 = vunpack.c.l.s4 1934713408
        %v1029 = vunpack.c.0.s8 %v1028
        %v1030 = vperm.slane %v1022, %v1029
        %v1031 = vrot.slane %v1016, 4
        %v1032 = vsel %vm730, 0.0, %v1031
        %v1033 = vrot.slane %v1020, 4
        %v1034 = vsel %vm730, 0.0, %v1033
        %v1035 = vrot.slane %v1026, 4
        %v1036 = vsel %vm730, 0.0, %v1035
        %v1037 = vrot.slane %v1030, 4
        %v1038 = vsel %vm730, 0.0, %v1037
        %1040 = vrot.lane.b32.xlu0 %v1032, 8
        %v1041 = vpop.permute.xlu0 %1040
        %1044 = vrot.lane.b32.xlu0 %v1020, 16
        %v1045 = vpop.permute.xlu0 %1044
        %1048 = vrot.lane.b32.xlu0 %v1034, 24
        %v1049 = vpop.permute.xlu0 %1048
        %1052 = vrot.lane.b32.xlu0 %v1026, 32
        %v1053 = vpop.permute.xlu0 %1052
        %1056 = vrot.lane.b32.xlu0 %v1036, 40
        %v1057 = vpop.permute.xlu0 %1056
        %1060 = vrot.lane.b32.xlu0 %v1030, 48
        %v1061 = vpop.permute.xlu0 %1060
        %1064 = vrot.lane.b32.xlu0 %v1038, 56
        %v1065 = vpop.permute.xlu0 %1064
        %v1067 = vsel %vm698, %v1016, %v1041
        %v1068 = vsel %vm797, %v1067, %v1045
        %v1069 = vsel %vm799, %v1068, %v1049
        %v1070 = vsel %vm604, %v1069, %v1053
        %v1071 = vsel %vm802, %v1070, %v1057
        %v1072 = vsel %vm804, %v1071, %v1061
        %v1073 = vsel %vm806, %v1072, %v1065
        %v1074 = vpack.c.bf16 %v1000, %v1000
        %1075 = vrot.lane.b32.xlu0 %v945, 112
        %v1076 = vpop.permute.xlu0 %1075
        %v1078 = vsel %vm698, %v1074, 0
        %v1081 = vsel %vm812, %v1076, 0
        %1083 = vmatpush.bf16.msra.mxu0 0
        %1084 = vmatpush.bf16.msra.mxu0 0
        %1085 = vmatpush.bf16.msra.mxu0 0
        %1086 = vmatpush.bf16.msra.mxu0 0
        %1087 = vmatpush.bf16.msra.mxu0 0
        %1088 = vmatpush.bf16.msra.mxu0 0
        %1089 = vmatpush.bf16.msra.mxu0 0
        %1090 = vmatpush.bf16.msra.mxu0 %v1081
        %1091 = vmatmul.bf16.gmra.mxu0 %v1078
        %v1092 = vpop.f32.mrf.mxu0
        %v1093 = vadd.f32 0.0, %v1092
        %v1094 = vpop.f32.mrf.mxu0
        %1095 = vdwg.mxu0
        %1096 = vrot.lane.b32.xlu0 %v831, 104
        %v1097 = vpop.permute.xlu0 %1096
        %1098 = vrot.lane.b32.xlu0 %v836, 104
        %v1099 = vpop.permute.xlu0 %1098
        %v1101 = vsel %vm698, %v1097, 0
        %v1104 = vsel %vm698, %v1099, 0
        %1106 = vmatpush.bf16.xpose.msra.mxu0 0
        %1107 = vmatpush.bf16.xpose.msra.mxu0 0
        %1108 = vmatpush.bf16.xpose.msra.mxu0 0
        %1109 = vmatpush.bf16.xpose.msra.mxu0 0
        %1110 = vmatpush.bf16.xpose.msra.mxu0 0
        %1111 = vmatpush.bf16.xpose.msra.mxu0 0
        %1112 = vmatpush.bf16.xpose.msra.mxu0 0
        %1113 = vmatpush.bf16.xpose.msra.mxu0 %v1104
        %1114 = vmatmul.bf16.gmra.mxu0 %v1101
        %v1115 = vpop.f32.mrf.mxu0
        %v1116 = vadd.f32 0.0, %v1115
        %v1117 = vpop.f32.mrf.mxu0
        %1118 = vdwg.mxu0
        %v1119 = vsel %vm698, %v1116, -inf
        %1120 = vmax.xlane.f32.xlu0 %v1119
        %v1121 = vpop.xlane.xlu0 %1120
        %v1122 = vsub.f32 %v1116, %v1121
        %v1123 = vmul.f32 %v1122, 1.442695
        %v1124 = vpow.pop %v1123
        %v1125 = vsel %vm698, %v1124, 0.0
        %1126 = vadd.xlane.f32.xlu0 %v1125
        %v1127 = vpop.xlane.xlu0 %1126
        %v1128 = vrcp.pop %v1127
        %v1129 = vmul.f32 %v1124, %v1128
        %v1130 = vrot.slane %v1129, 4
        %v1131 = vsel %vm730, 0.0, %v1130
        %v1133 = vunpack.c.l.s4 1983009808
        %v1134 = vunpack.c.0.s8 %v1133
        %v1135 = vperm.slane %v1129, %v1134
        %v1137 = vunpack.c.l.s4 1983009808
        %v1138 = vunpack.c.0.s8 %v1137
        %v1139 = vperm.slane %v1131, %v1138
        %v1140 = vrot.slane %v1135, 4
        %v1141 = vsel %vm730, 0.0, %v1140
        %v1143 = vunpack.c.l.s4 1934713408
        %v1144 = vunpack.c.0.s8 %v1143
        %v1145 = vperm.slane %v1135, %v1144
        %v1147 = vunpack.c.l.s4 1934713408
        %v1148 = vunpack.c.0.s8 %v1147
        %v1149 = vperm.slane %v1141, %v1148
        %v1150 = vrot.slane %v1139, 4
        %v1151 = vsel %vm730, 0.0, %v1150
        %v1153 = vunpack.c.l.s4 1934713408
        %v1154 = vunpack.c.0.s8 %v1153
        %v1155 = vperm.slane %v1139, %v1154
        %v1157 = vunpack.c.l.s4 1934713408
        %v1158 = vunpack.c.0.s8 %v1157
        %v1159 = vperm.slane %v1151, %v1158
        %v1160 = vrot.slane %v1145, 4
        %v1161 = vsel %vm730, 0.0, %v1160
        %v1162 = vrot.slane %v1149, 4
        %v1163 = vsel %vm730, 0.0, %v1162
        %v1164 = vrot.slane %v1155, 4
        %v1165 = vsel %vm730, 0.0, %v1164
        %v1166 = vrot.slane %v1159, 4
        %v1167 = vsel %vm730, 0.0, %v1166
        %1169 = vrot.lane.b32.xlu0 %v1161, 8
        %v1170 = vpop.permute.xlu0 %1169
        %1173 = vrot.lane.b32.xlu0 %v1149, 16
        %v1174 = vpop.permute.xlu0 %1173
        %1177 = vrot.lane.b32.xlu0 %v1163, 24
        %v1178 = vpop.permute.xlu0 %1177
        %1181 = vrot.lane.b32.xlu0 %v1155, 32
        %v1182 = vpop.permute.xlu0 %1181
        %1185 = vrot.lane.b32.xlu0 %v1165, 40
        %v1186 = vpop.permute.xlu0 %1185
        %1189 = vrot.lane.b32.xlu0 %v1159, 48
        %v1190 = vpop.permute.xlu0 %1189
        %1193 = vrot.lane.b32.xlu0 %v1167, 56
        %v1194 = vpop.permute.xlu0 %1193
        %v1196 = vsel %vm698, %v1145, %v1170
        %v1197 = vsel %vm797, %v1196, %v1174
        %v1198 = vsel %vm799, %v1197, %v1178
        %v1199 = vsel %vm604, %v1198, %v1182
        %v1200 = vsel %vm802, %v1199, %v1186
        %v1201 = vsel %vm804, %v1200, %v1190
        %v1202 = vsel %vm806, %v1201, %v1194
        %v1203 = vpack.c.bf16 %v1129, %v1129
        %1204 = vrot.lane.b32.xlu0 %v945, 104
        %v1205 = vpop.permute.xlu0 %1204
        %v1207 = vsel %vm698, %v1203, 0
        %v1210 = vsel %vm812, %v1205, 0
        %1212 = vmatpush.bf16.msra.mxu0 0
        %1213 = vmatpush.bf16.msra.mxu0 0
        %1214 = vmatpush.bf16.msra.mxu0 0
        %1215 = vmatpush.bf16.msra.mxu0 0
        %1216 = vmatpush.bf16.msra.mxu0 0
        %1217 = vmatpush.bf16.msra.mxu0 0
        %1218 = vmatpush.bf16.msra.mxu0 0
        %1219 = vmatpush.bf16.msra.mxu0 %v1210
        %1220 = vmatmul.bf16.gmra.mxu0 %v1207
        %v1221 = vpop.f32.mrf.mxu0
        %v1222 = vadd.f32 0.0, %v1221
        %v1223 = vpop.f32.mrf.mxu0
        %1224 = vdwg.mxu0
        %v1226 = vrot.slane %v941, 7
        %v1229 = vrot.slane %v1073, 6
        %v1232 = vrot.slane %v1202, 5
        %vm1234 = vcmask 1040384
        %v1235 = vsel %vm1234, %v807, %v1226
        %vm1236 = vcmask 1041408
        %v1237 = vsel %vm1236, %v1235, %v1229
        %vm1238 = vcmask 1042432
        %v1239 = vsel %vm1238, %v1237, %v1232
        %vm1240 = vcmask 519168
        %1241 = vst.msk [vmem:[%s564] sm:$0xf] %vm1240, %v1239
        %1243 = vrot.lane.b32.xlu0 %v964, 8
        %v1244 = vpop.permute.xlu0 %1243
        %1247 = vrot.lane.b32.xlu0 %v1093, 16
        %v1248 = vpop.permute.xlu0 %1247
        %1251 = vrot.lane.b32.xlu0 %v1222, 24
        %v1252 = vpop.permute.xlu0 %1251
        %v1254 = vsel %vm698, %v826, %v1244
        %v1255 = vsel %vm797, %v1254, %v1248
        %v1256 = vsel %vm799, %v1255, %v1252
        %v1257 = vpack.c.bf16 %v1256, %v1256
        %v1258 = vld [vmem:[#allocation14] sm:$0xf]
        %v1259 = vld [vmem:[#allocation14 + $0x4] sm:$0xf]
        %v1260 = vld [vmem:[#allocation14 + $0x8] sm:$0xf]
        %v1261 = vld [vmem:[#allocation14 + $0xc] sm:$0xf]
        %v1262 = vld [vmem:[%s11] sm:$0x1]
        %v1264 = vperm.slane %v1262, 0
        %v1270 = vunpack.c.l.b16 %v1258
        %v1271 = vunpack.c.l.b16 %v1259
        %v1272 = vunpack.c.l.b16 %v1260
        %v1273 = vunpack.c.l.b16 %v1261
        %v1274 = vpack.c.b16 %v1271, %v1270
        %v1275 = vpack.c.b16 %v1273, %v1272
        %v1279 = vsel %vm604, %v1257, 0
        %1281 = vmatpush.bf16.msra.mxu0 0
        %1282 = vmatpush.bf16.msra.mxu0 0
        %1283 = vmatpush.bf16.msra.mxu0 0
        %1284 = vmatpush.bf16.msra.mxu0 0
        %1285 = vmatpush.bf16.msra.mxu0 0
        %1286 = vmatpush.bf16.msra.mxu0 0
        %1287 = vmatpush.bf16.msra.mxu0 %v1275
        %1288 = vmatpush.bf16.msra.mxu0 %v1274
        %1289 = vmatmul.bf16.gmra.mxu0 %v1279
        %v1290 = vpop.f32.mrf.mxu0
        %v1291 = vadd.f32 %v1264, %v1290
        %v1292 = vpop.f32.mrf.mxu0
        %1293 = vdwg.mxu0
        %1294 = vst.msk [vmem:[%s557] sm:$0xff] %vm604, %v1291
        %s1295 = sand.u32 %s304, 1
        %s1296 = scalar_lea.sflag [#allocation5], %s1295
        %s1297 = sand.u32 %s304, 1
        %s1298 = smul.addr %s1297, 8
        %s1299 = scalar_lea.vmem [#allocation16], %s1298
        %s1300 = sand.u32 %s330, 1
        %s1301 = scalar_lea.sflag [#allocation18], %s1300
        %s1302 = sand.u32 %s330, 1
        %s1303 = smul.addr %s1302, 4
        %s1304 = scalar_lea.vmem [#allocation17], %s1303
        // Predicated region
        $region97: #{tpu_custom_call.1} parent=67 // pred_check
          %p1305 = pneg %p314
        $region98: #{tpu_custom_call.1} parent=67 // pred_check_branch
          %1307 = sbr.rel (%p1305) target = $region100
        $region99: #{tpu_custom_call.1} parent=67 // pred_region
          %1309 = vsyncadd %s1296, 0
          %s1310 = smul.addr %s39, 8
          %s1311 = scalar_lea.hbm %s12, %s1310
          %s1313 = sshll.u32 %s1299, 4
          %s1314 = int_to_ptr.vmem [resolvable:$true] %s1313
          %s1315 = sshll.u32 %s1311, 4
          %s1316 = int_to_ptr.hbm [resolvable:$true] %s1315
          %1318 = dma.vmem_to_hbm [thread:$0]  %s1314, 128, %s1316, %s1296
        $region100: #{tpu_custom_call.1} parent=67 // pred_fallthru
          _
        // Predicated region
        $region101: #{tpu_custom_call.1} parent=67 // pred_check
          %p1319 = pneg %p340
        $region102: #{tpu_custom_call.1} parent=67 // pred_check_branch
          %1321 = sbr.rel (%p1319) target = $region104
        $region103: #{tpu_custom_call.1} parent=67 // pred_region
          %1323 = vsyncadd %s1301, 0
          %s1324 = smul.addr %s39, 4
          %s1325 = scalar_lea.hbm %s13, %s1324
          %s1327 = sshll.u32 %s1304, 4
          %s1328 = int_to_ptr.vmem [resolvable:$true] %s1327
          %s1329 = sshll.u32 %s1325, 4
          %s1330 = int_to_ptr.hbm [resolvable:$true] %s1329
          %1332 = dma.vmem_to_hbm [thread:$0]  %s1328, 64, %s1330, %s1301
        $region104: #{tpu_custom_call.1} parent=67 // pred_fallthru
          _
      $region68: #{tpu_custom_call.1} parent=5 // pred_fallthru
        _
      %p1333 = scmp.le.s32.totalorder 2, %s34
      // Predicated region
      $region105: #{tpu_custom_call.1} parent=5 // pred_check
        %p1334 = pneg %p1333
      $region106: #{tpu_custom_call.1} parent=5 // pred_check_branch
        %1336 = sbr.rel (%p1334) target = $region108
      $region107: #{tpu_custom_call.1} parent=5 // pred_region
        %s1337 = ssub.s32 %s34, 2
        // Predicated region
        $region109: #{tpu_custom_call.1} parent=107 // pred_check
          %p1338 = pneg %p320
        $region110: #{tpu_custom_call.1} parent=107 // pred_check_branch
          %1340 = sbr.rel (%p1338) target = $region112
        $region111: #{tpu_custom_call.1} parent=107 // pred_region
          %s1341 = sand.u32 %s305, 1
          %s1342 = scalar_lea.sflag [#allocation5], %s1341
          %s1343 = sand.u32 %s305, 1
          %s1344 = smul.addr %s1343, 8
          %s1345 = scalar_lea.vmem [#allocation16], %s1344
          %1347 = dma.done %s1342, 128
        $region112: #{tpu_custom_call.1} parent=107 // pred_fallthru
          _
        // Predicated region
        $region113: #{tpu_custom_call.1} parent=107 // pred_check
          %p1348 = pneg %p346
        $region114: #{tpu_custom_call.1} parent=107 // pred_check_branch
          %1350 = sbr.rel (%p1348) target = $region116
        $region115: #{tpu_custom_call.1} parent=107 // pred_region
          %s1351 = sand.u32 %s331, 1
          %s1352 = scalar_lea.sflag [#allocation18], %s1351
          %s1353 = sand.u32 %s331, 1
          %s1354 = smul.addr %s1353, 4
          %s1355 = scalar_lea.vmem [#allocation17], %s1354
          %1357 = dma.done %s1352, 64
        $region116: #{tpu_custom_call.1} parent=107 // pred_fallthru
          _
      $region108: #{tpu_custom_call.1} parent=5 // pred_fallthru
        _
    $region6: #{tpu_custom_call.1} parent=1 // loop_footer
      %s38 = sadd.s32 1, %s34
    $region7: #{tpu_custom_call.1} parent=1 // loop_footer_branch
      %33 = sbr.rel target = $region3
    $region8: #{tpu_custom_call.1} parent=1 // loop_exit
      _
    %1358 = vsyncpa [#allocation4], 1
    %s1359 = scalar_lea.sflag [#allocation4], 1
    %1360 = vsyncpa %s1359, 1
    %1361 = vsyncpa [#allocation9], 1
    %1362 = vsyncpa [#allocation12], 1
    %1363 = vsyncpa [#allocation15], 1
    %1364 = vsyncpa [#allocation5], 1
    %s1365 = scalar_lea.sflag [#allocation5], 1
    %1366 = vsyncpa %s1365, 1
    %1367 = vsyncpa [#allocation18], 1
    %s1368 = scalar_lea.sflag [#allocation18], 1
    %1369 = vsyncpa %s1368, 1
    %1370 = vsyncpa [#allocation6], 1
    %s1371 = scalar_lea.sflag [#allocation6], 1
    %1372 = vsyncpa %s1371, 1

</llo_original>
